<compile_context>
chip_gen: v7x
topology: tpu7x:2x2x1
jax: 0.10.0
libtpu: 0.0.40
codegen_flags: <defaults>
</compile_context>

<pallas_src>
import math
import functools

import jax
import jax.numpy as jnp
from jax.experimental import pallas as pl
from jax.experimental.pallas import tpu as pltpu

# ---- problem sizes (small, consistent with the module) ----
B = 2        # batch
S = 8        # sequence length
D = 32       # d_model
H = 4        # heads
D_K = D // H
D_FF = 64
EPS = 1e-6


def _layer_norm(y):
    # torch LayerNormalization: alpha=1, bias=0 (scalar params),
    # unbiased std (torch.std default), eps added to the *std*.
    mean = jnp.mean(y, axis=-1, keepdims=True)
    diff = y - mean
    var = jnp.sum(diff * diff, axis=-1, keepdims=True) * (1.0 / (y.shape[-1] - 1))
    std = jnp.sqrt(var)
    return diff / (std + EPS)


def encoder_block_kernel(x_ref, bias_ref, wqkv_ref, wo_ref, w1_ref, b1_ref,
                         w2_ref, b2_ref, out_ref, *, nb, seq, h, d_k):
    d = h * d_k
    n = nb * seq

    # Flatten the (nb, S, D) slab to (N, D): leading-dim merge only (free).
    x = x_ref[...].astype(jnp.float32).reshape(n, d)
    bias = bias_ref[...]                                     # (N, N) additive

    # ---- residual connection 0: x + MHA(LN(x)) ----
    ln1 = _layer_norm(x)                                     # (N, D)

    # Fused head-major Q/K/V projection: one batched einsum, heads live in a
    # major dim from the start -> zero lane slices / transposes downstream.
    ln1_b = jnp.broadcast_to(ln1[None], (3 * h, n, d))       # (3h, N, D)
    qkvh = jnp.einsum("hnd,hde->hne", ln1_b, wqkv_ref[...],
                      preferred_element_type=jnp.float32)    # (3h, N, d_k)
    qh = qkvh[0:h]                                           # (h, N, d_k)
    kh = qkvh[h:2 * h]
    vh = qkvh[2 * h:3 * h]

    scale = 1.0 / math.sqrt(d_k)
    scores = jnp.einsum("hqd,hkd->hqk", qh, kh,
                        preferred_element_type=jnp.float32) * scale
    scores = scores + bias[None]                             # additive mask
    scores = scores - jnp.max(scores, axis=-1, keepdims=True)
    p = jnp.exp(scores)
    p = p * pl.reciprocal(jnp.sum(p, axis=-1, keepdims=True), approx=True)
    heads = jnp.einsum("hqk,hkd->hqd", p, vh,
                       preferred_element_type=jnp.float32)   # (h, N, d_k)

    # Output projection without concatenating heads: accumulate each head
    # against its head-major (d_k, D) block of Wo^T (leading-axis Ref view —
    # no sublane slicing of a loaded value).
    attn = jnp.dot(heads[0], wo_ref[0], preferred_element_type=jnp.float32)
    for hh in range(1, h):
        attn = attn + jnp.dot(heads[hh], wo_ref[hh],
                              preferred_element_type=jnp.float32)
    x1 = x + attn

    # ---- residual connection 1: x1 + FFN(LN(x1)) ----
    ln2 = _layer_norm(x1)
    hmid = jnp.dot(ln2, w1_ref[...], preferred_element_type=jnp.float32) + b1_ref[...]
    hmid = jnp.maximum(hmid, 0.0)                            # relu
    ff = jnp.dot(hmid, w2_ref[...], preferred_element_type=jnp.float32) + b2_ref[...]

    out_ref[...] = (x1 + ff).reshape(nb, seq, d).astype(out_ref.dtype)


def _pick_block_batch(batch):
    # v7x has 2 TensorCores/chip: keep 1 batch per grid step so the "parallel"
    # batch axis is split across cores.  Single-TC chips (v2..v6e): fold the
    # whole batch into one grid step (removes ~0.35us/step overhead, doubles
    # sublane utilization of every LN / matmul).
    try:
        kind = jax.devices()[0].device_kind.lower()
    except Exception:
        kind = ""
    return 1 if ("v7" in kind or "7x" in kind) else batch


def _pack_qkv_heads(wq_t, wk_t, wv_t, h, d_k):
    # (D, D) weights (already W^T) -> fused head-major weight (3h, D, d_k).
    d = h * d_k

    def per_head(w):  # (D, D) -> (h, D, d_k), head hh = columns hh*d_k:(hh+1)*d_k
        return jnp.transpose(w.reshape(d, h, d_k), (1, 0, 2))

    return jnp.concatenate([per_head(wq_t), per_head(wk_t), per_head(wv_t)], axis=0)


def _attention_bias(mask, nb):
    # Additive bias: 0 where attended, -1e9 where masked.  When nb batches are
    # folded into one kernel step, cross-batch positions are fully masked
    # (block-diagonal), which reproduces per-batch attention exactly.
    s = mask.shape[0]
    m = mask.astype(jnp.float32)
    if nb == 1:
        full = m
    else:
        blkdiag = jnp.kron(jnp.eye(nb, dtype=jnp.float32),
                           jnp.ones((s, s), jnp.float32))
        full = blkdiag * jnp.tile(m, (nb, nb))
    return (full - 1.0) * 1e9


def encoder_block(x, mask, params, *, block_b=None):
    """x: (B, S, D) f32; mask: (S, S) f32 (1=attend, 0=masked); params pre-transposed."""
    b, s, d = x.shape
    h = H
    d_k = d // h
    if block_b is None:
        block_b = _pick_block_batch(b)
    assert b % block_b == 0
    n = block_b * s

    wqkv_h = _pack_qkv_heads(params["wq_t"], params["wk_t"], params["wv_t"], h, d_k)
    wo_h = params["wo_t"].reshape(h, d_k, d)          # head-major Wo^T blocks
    bias = _attention_bias(mask, block_b)

    kernel = functools.partial(encoder_block_kernel, nb=block_b, seq=s, h=h, d_k=d_k)
    rep = lambda shape: pl.BlockSpec(shape, lambda i, _shape=shape: tuple(0 for _ in _shape))

    return pl.pallas_call(
        kernel,
        out_shape=jax.ShapeDtypeStruct((b, s, d), jnp.float32),
        grid=(b // block_b,),
        in_specs=[
            pl.BlockSpec((block_b, s, d), lambda i: (i, 0, 0)),   # x slab
            rep((n, n)),                                           # additive mask bias
            rep((3 * h, d, d_k)),                                  # fused head-major QKV weight
            rep((h, d_k, d)),                                      # head-major Wo^T
            rep((d, D_FF)), rep((1, D_FF)),                        # W1^T, b1
            rep((D_FF, d)), rep((1, d)),                           # W2^T, b2
        ],
        out_specs=pl.BlockSpec((block_b, s, d), lambda i: (i, 0, 0)),
        compiler_params=pltpu.CompilerParams(
            dimension_semantics=("parallel",)),
    )(x, bias, wqkv_h, wo_h,
      params["w1_t"], params["b1"], params["w2_t"], params["b2"])


def encoder_block_ref(x, mask, params):
    """Pure-JAX reference mirroring the PyTorch forward (eval mode)."""
    xf = x.astype(jnp.float32)

    def ln(y):
        mean = jnp.mean(y, axis=-1, keepdims=True)
        var = jnp.sum((y - mean) ** 2, axis=-1, keepdims=True) / (y.shape[-1] - 1)
        return (y - mean) / (jnp.sqrt(var) + EPS)

    # MHA
    l1 = ln(xf)
    q = l1 @ params["wq_t"]
    k = l1 @ params["wk_t"]
    v = l1 @ params["wv_t"]

    def split(t):  # (B,S,D) -> (B,H,S,Dk)
        return t.reshape(B, S, H, D_K).transpose(0, 2, 1, 3)

    qh, kh, vh = split(q), split(k), split(v)
    scores = jnp.einsum("bhqd,bhkd->bhqk", qh, kh) / math.sqrt(D_K)
    scores = jnp.where(mask[None, None] == 0.0, -1e9, scores)
    p = jax.nn.softmax(scores, axis=-1)
    o = jnp.einsum("bhqk,bhkd->bhqd", p, vh).transpose(0, 2, 1, 3).reshape(B, S, D)
    o = o @ params["wo_t"]
    x1 = xf + o
    # FFN
    l2 = ln(x1)
    hmid = jnp.maximum(l2 @ params["w1_t"] + params["b1"], 0.0)
    ff = hmid @ params["w2_t"] + params["b2"]
    return x1 + ff


if __name__ == "__main__":
    key = jax.random.PRNGKey(0)
    keys = jax.random.split(key, 10)

    # Deterministic parameter init (linear weights stored pre-transposed so the
    # kernel computes y = x @ W^T directly).
    scale = 0.1
    params = {
        "wq_t": scale * jax.random.normal(keys[0], (D, D), jnp.float32),
        "wk_t": scale * jax.random.normal(keys[1], (D, D), jnp.float32),
        "wv_t": scale * jax.random.normal(keys[2], (D, D), jnp.float32),
        "wo_t": scale * jax.random.normal(keys[3], (D, D), jnp.float32),
        "w1_t": scale * jax.random.normal(keys[4], (D, D_FF), jnp.float32),
        "b1":   scale * jax.random.normal(keys[5], (1, D_FF), jnp.float32),
        "w2_t": scale * jax.random.normal(keys[6], (D_FF, D), jnp.float32),
        "b2":   scale * jax.random.normal(keys[7], (1, D), jnp.float32),
    }

    x = jax.random.normal(keys[8], (B, S, D), jnp.float32)
    # causal-style mask (1.0 = attend, 0.0 = masked), broadcast over batch/heads
    mask = jnp.tril(jnp.ones((S, S), jnp.float32))

    out = encoder_block(x, mask, params)
    out = jax.block_until_ready(out)

    ref = encoder_block_ref(x, mask, params)
    assert out.shape == (B, S, D)
    # Tolerance allows for the EUP approximate-reciprocal softmax denominator.
    assert jnp.allclose(out, ref, atol=2e-3, rtol=2e-3), float(jnp.max(jnp.abs(out - ref)))

    print("KERNEL_OK")
</pallas_src>

<mosaic_0001>
module attributes {stable_mosaic.version = 11 : i64} {
  func.func @encoder_block_kernel(%arg0: i32, %arg1: memref<2x8x32xf32, #tpu.memory_space<vmem>>, %arg2: memref<16x16xf32, #tpu.memory_space<vmem>>, %arg3: memref<12x32x8xf32, #tpu.memory_space<vmem>>, %arg4: memref<4x8x32xf32, #tpu.memory_space<vmem>>, %arg5: memref<32x64xf32, #tpu.memory_space<vmem>>, %arg6: memref<1x64xf32, #tpu.memory_space<vmem>>, %arg7: memref<64x32xf32, #tpu.memory_space<vmem>>, %arg8: memref<1x32xf32, #tpu.memory_space<vmem>>, %arg9: memref<2x8x32xf32, #tpu.memory_space<vmem>>) attributes {dimension_semantics = [#tpu.dimension_semantics<parallel>], iteration_bounds = array<i64: 1>, scalar_prefetch = 0 : i64, scratch_operands = 0 : i64, tpu.core_type = #tpu.core_type<tc>, window_params = [{transform_indices = @transform_0, window_bounds = array<i64: 2, 8, 32>}, {pipeline_mode = #tpu.pipeline_mode<synchronous>, transform_indices = @transform_1, window_bounds = array<i64: 16, 16>}, {pipeline_mode = #tpu.pipeline_mode<synchronous>, transform_indices = @transform_2, window_bounds = array<i64: 12, 32, 8>}, {pipeline_mode = #tpu.pipeline_mode<synchronous>, transform_indices = @transform_3, window_bounds = array<i64: 4, 8, 32>}, {pipeline_mode = #tpu.pipeline_mode<synchronous>, transform_indices = @transform_4, window_bounds = array<i64: 32, 64>}, {pipeline_mode = #tpu.pipeline_mode<synchronous>, transform_indices = @transform_5, window_bounds = array<i64: 1, 64>}, {pipeline_mode = #tpu.pipeline_mode<synchronous>, transform_indices = @transform_6, window_bounds = array<i64: 64, 32>}, {pipeline_mode = #tpu.pipeline_mode<synchronous>, transform_indices = @transform_7, window_bounds = array<i64: 1, 32>}, {transform_indices = @transform_8, window_bounds = array<i64: 2, 8, 32>}]} {
    %c0 = arith.constant 0 : index
    %c0_0 = arith.constant 0 : index
    %c0_1 = arith.constant 0 : index
    %0 = vector.load %arg1[%c0, %c0_0, %c0_1] : memref<2x8x32xf32, #tpu.memory_space<vmem>>, vector<2x8x32xf32>
    %1 = vector.shape_cast %0 : vector<2x8x32xf32> to vector<16x32xf32>
    %c0_2 = arith.constant 0 : index
    %c0_3 = arith.constant 0 : index
    %2 = vector.load %arg2[%c0_2, %c0_3] : memref<16x16xf32, #tpu.memory_space<vmem>>, vector<16x16xf32>
    %cst = arith.constant dense<0.000000e+00> : vector<16xf32>
    %3 = vector.multi_reduction <add>, %1, %cst [1] : vector<16x32xf32> to vector<16xf32>
    %4 = vector.shape_cast %3 : vector<16xf32> to vector<16x1xf32>
    %cst_4 = arith.constant 3.200000e+01 : f32
    %5 = vector.broadcast %cst_4 : f32 to vector<16x1xf32>
    %6 = arith.divf %4, %5 : vector<16x1xf32>
    %7 = vector.broadcast %6 : vector<16x1xf32> to vector<16x32xf32>
    %8 = arith.subf %1, %7 : vector<16x32xf32>
    %9 = arith.mulf %8, %8 : vector<16x32xf32>
    %cst_5 = arith.constant dense<0.000000e+00> : vector<16xf32>
    %10 = vector.multi_reduction <add>, %9, %cst_5 [1] : vector<16x32xf32> to vector<16xf32>
    %11 = vector.shape_cast %10 : vector<16xf32> to vector<16x1xf32>
    %cst_6 = arith.constant 0.0322580636 : f32
    %12 = vector.broadcast %cst_6 : f32 to vector<16x1xf32>
    %13 = arith.mulf %11, %12 : vector<16x1xf32>
    %14 = math.sqrt %13 : vector<16x1xf32>
    %cst_7 = arith.constant 9.99999997E-7 : f32
    %15 = vector.broadcast %cst_7 : f32 to vector<16x1xf32>
    %16 = arith.addf %14, %15 : vector<16x1xf32>
    %17 = vector.broadcast %16 : vector<16x1xf32> to vector<16x32xf32>
    %18 = arith.divf %8, %17 : vector<16x32xf32>
    %19 = vector.shape_cast %18 : vector<16x32xf32> to vector<1x16x32xf32>
    %20 = vector.shape_cast %19 : vector<1x16x32xf32> to vector<1x16x32xf32>
    %21 = vector.broadcast %20 : vector<1x16x32xf32> to vector<12x16x32xf32>
    %c0_8 = arith.constant 0 : index
    %c0_9 = arith.constant 0 : index
    %c0_10 = arith.constant 0 : index
    %22 = vector.load %arg3[%c0_8, %c0_9, %c0_10] : memref<12x32x8xf32, #tpu.memory_space<vmem>>, vector<12x32x8xf32>
    "tpu.trace_start"() <{level = 10 : i32, message = "hnd,hde->hne"}> : () -> ()
    %cst_11 = arith.constant dense<0.000000e+00> : vector<12x16x8xf32>
    %23 = tpu.matmul %21, %22, %cst_11 {dimension_numbers = #tpu.dot_dimension_numbers<[2], [1], [1], [2], [0, 0, 0, 1, 1, 2], [0], [0]>} : vector<12x16x32xf32>, vector<12x32x8xf32>, vector<12x16x8xf32> -> vector<12x16x8xf32>
    "tpu.trace_stop"() : () -> ()
    %24 = vector.extract_strided_slice %23 {offsets = [0, 0, 0], sizes = [4, 16, 8], strides = [1, 1, 1]} : vector<12x16x8xf32> to vector<4x16x8xf32>
    %25 = vector.extract_strided_slice %23 {offsets = [4, 0, 0], sizes = [4, 16, 8], strides = [1, 1, 1]} : vector<12x16x8xf32> to vector<4x16x8xf32>
    %26 = vector.extract_strided_slice %23 {offsets = [8, 0, 0], sizes = [4, 16, 8], strides = [1, 1, 1]} : vector<12x16x8xf32> to vector<4x16x8xf32>
    "tpu.trace_start"() <{level = 10 : i32, message = "hqd,hkd->hqk"}> : () -> ()
    %cst_12 = arith.constant dense<0.000000e+00> : vector<4x16x16xf32>
    %27 = tpu.matmul %24, %25, %cst_12 {dimension_numbers = #tpu.dot_dimension_numbers<[2], [2], [1], [1], [0, 0, 0, 1, 1, 1], [0], [0]>} : vector<4x16x8xf32>, vector<4x16x8xf32>, vector<4x16x16xf32> -> vector<4x16x16xf32>
    "tpu.trace_stop"() : () -> ()
    %cst_13 = arith.constant 0.353553385 : f32
    %28 = vector.broadcast %cst_13 : f32 to vector<4x16x16xf32>
    %29 = arith.mulf %27, %28 : vector<4x16x16xf32>
    %30 = vector.shape_cast %2 : vector<16x16xf32> to vector<1x16x16xf32>
    %31 = vector.broadcast %30 : vector<1x16x16xf32> to vector<4x16x16xf32>
    %32 = arith.addf %29, %31 : vector<4x16x16xf32>
    %cst_14 = arith.constant dense<0xFF800000> : vector<4x16xf32>
    %33 = vector.multi_reduction <maximumf>, %32, %cst_14 [2] : vector<4x16x16xf32> to vector<4x16xf32>
    %34 = vector.shape_cast %33 : vector<4x16xf32> to vector<4x16x1xf32>
    %35 = vector.broadcast %34 : vector<4x16x1xf32> to vector<4x16x16xf32>
    %36 = arith.subf %32, %35 : vector<4x16x16xf32>
    %37 = math.exp %36 : vector<4x16x16xf32>
    %cst_15 = arith.constant dense<0.000000e+00> : vector<4x16xf32>
    %38 = vector.multi_reduction <add>, %37, %cst_15 [2] : vector<4x16x16xf32> to vector<4x16xf32>
    %39 = vector.shape_cast %38 : vector<4x16xf32> to vector<4x16x1xf32>
    %40 = tpu.reciprocal %39 {approx = true} : vector<4x16x1xf32> -> vector<4x16x1xf32>
    %41 = vector.broadcast %40 : vector<4x16x1xf32> to vector<4x16x16xf32>
    %42 = arith.mulf %37, %41 : vector<4x16x16xf32>
    "tpu.trace_start"() <{level = 10 : i32, message = "hqk,hkd->hqd"}> : () -> ()
    %cst_16 = arith.constant dense<0.000000e+00> : vector<4x16x8xf32>
    %43 = tpu.matmul %42, %26, %cst_16 {dimension_numbers = #tpu.dot_dimension_numbers<[2], [1], [1], [2], [0, 0, 0, 1, 1, 2], [0], [0]>} : vector<4x16x16xf32>, vector<4x16x8xf32>, vector<4x16x8xf32> -> vector<4x16x8xf32>
    "tpu.trace_stop"() : () -> ()
    %44 = vector.extract_strided_slice %43 {offsets = [0, 0, 0], sizes = [1, 16, 8], strides = [1, 1, 1]} : vector<4x16x8xf32> to vector<1x16x8xf32>
    %45 = vector.shape_cast %44 : vector<1x16x8xf32> to vector<16x8xf32>
    %c0_17 = arith.constant 0 : index
    %c0_18 = arith.constant 0 : index
    %c0_19 = arith.constant 0 : index
    %46 = vector.load %arg4[%c0_17, %c0_18, %c0_19] : memref<4x8x32xf32, #tpu.memory_space<vmem>>, vector<1x8x32xf32>
    %47 = vector.shape_cast %46 : vector<1x8x32xf32> to vector<8x32xf32>
    %cst_20 = arith.constant dense<0.000000e+00> : vector<16x32xf32>
    %48 = tpu.matmul %45, %47, %cst_20 {dimension_numbers = #tpu.dot_dimension_numbers<[1], [0], [0], [1], [0, 0, 1, 1], [], []>} : vector<16x8xf32>, vector<8x32xf32>, vector<16x32xf32> -> vector<16x32xf32>
    %49 = vector.extract_strided_slice %43 {offsets = [1, 0, 0], sizes = [1, 16, 8], strides = [1, 1, 1]} : vector<4x16x8xf32> to vector<1x16x8xf32>
    %50 = vector.shape_cast %49 : vector<1x16x8xf32> to vector<16x8xf32>
    %c1 = arith.constant 1 : index
    %c0_21 = arith.constant 0 : index
    %c0_22 = arith.constant 0 : index
    %51 = vector.load %arg4[%c1, %c0_21, %c0_22] : memref<4x8x32xf32, #tpu.memory_space<vmem>>, vector<1x8x32xf32>
    %52 = vector.shape_cast %51 : vector<1x8x32xf32> to vector<8x32xf32>
    %cst_23 = arith.constant dense<0.000000e+00> : vector<16x32xf32>
    %53 = tpu.matmul %50, %52, %cst_23 {dimension_numbers = #tpu.dot_dimension_numbers<[1], [0], [0], [1], [0, 0, 1, 1], [], []>} : vector<16x8xf32>, vector<8x32xf32>, vector<16x32xf32> -> vector<16x32xf32>
    %54 = arith.addf %48, %53 : vector<16x32xf32>
    %55 = vector.extract_strided_slice %43 {offsets = [2, 0, 0], sizes = [1, 16, 8], strides = [1, 1, 1]} : vector<4x16x8xf32> to vector<1x16x8xf32>
    %56 = vector.shape_cast %55 : vector<1x16x8xf32> to vector<16x8xf32>
    %c2 = arith.constant 2 : index
    %c0_24 = arith.constant 0 : index
    %c0_25 = arith.constant 0 : index
    %57 = vector.load %arg4[%c2, %c0_24, %c0_25] : memref<4x8x32xf32, #tpu.memory_space<vmem>>, vector<1x8x32xf32>
    %58 = vector.shape_cast %57 : vector<1x8x32xf32> to vector<8x32xf32>
    %cst_26 = arith.constant dense<0.000000e+00> : vector<16x32xf32>
    %59 = tpu.matmul %56, %58, %cst_26 {dimension_numbers = #tpu.dot_dimension_numbers<[1], [0], [0], [1], [0, 0, 1, 1], [], []>} : vector<16x8xf32>, vector<8x32xf32>, vector<16x32xf32> -> vector<16x32xf32>
    %60 = arith.addf %54, %59 : vector<16x32xf32>
    %61 = vector.extract_strided_slice %43 {offsets = [3, 0, 0], sizes = [1, 16, 8], strides = [1, 1, 1]} : vector<4x16x8xf32> to vector<1x16x8xf32>
    %62 = vector.shape_cast %61 : vector<1x16x8xf32> to vector<16x8xf32>
    %c3 = arith.constant 3 : index
    %c0_27 = arith.constant 0 : index
    %c0_28 = arith.constant 0 : index
    %63 = vector.load %arg4[%c3, %c0_27, %c0_28] : memref<4x8x32xf32, #tpu.memory_space<vmem>>, vector<1x8x32xf32>
    %64 = vector.shape_cast %63 : vector<1x8x32xf32> to vector<8x32xf32>
    %cst_29 = arith.constant dense<0.000000e+00> : vector<16x32xf32>
    %65 = tpu.matmul %62, %64, %cst_29 {dimension_numbers = #tpu.dot_dimension_numbers<[1], [0], [0], [1], [0, 0, 1, 1], [], []>} : vector<16x8xf32>, vector<8x32xf32>, vector<16x32xf32> -> vector<16x32xf32>
    %66 = arith.addf %60, %65 : vector<16x32xf32>
    %67 = arith.addf %1, %66 : vector<16x32xf32>
    %cst_30 = arith.constant dense<0.000000e+00> : vector<16xf32>
    %68 = vector.multi_reduction <add>, %67, %cst_30 [1] : vector<16x32xf32> to vector<16xf32>
    %69 = vector.shape_cast %68 : vector<16xf32> to vector<16x1xf32>
    %cst_31 = arith.constant 3.200000e+01 : f32
    %70 = vector.broadcast %cst_31 : f32 to vector<16x1xf32>
    %71 = arith.divf %69, %70 : vector<16x1xf32>
    %72 = vector.broadcast %71 : vector<16x1xf32> to vector<16x32xf32>
    %73 = arith.subf %67, %72 : vector<16x32xf32>
    %74 = arith.mulf %73, %73 : vector<16x32xf32>
    %cst_32 = arith.constant dense<0.000000e+00> : vector<16xf32>
    %75 = vector.multi_reduction <add>, %74, %cst_32 [1] : vector<16x32xf32> to vector<16xf32>
    %76 = vector.shape_cast %75 : vector<16xf32> to vector<16x1xf32>
    %cst_33 = arith.constant 0.0322580636 : f32
    %77 = vector.broadcast %cst_33 : f32 to vector<16x1xf32>
    %78 = arith.mulf %76, %77 : vector<16x1xf32>
    %79 = math.sqrt %78 : vector<16x1xf32>
    %cst_34 = arith.constant 9.99999997E-7 : f32
    %80 = vector.broadcast %cst_34 : f32 to vector<16x1xf32>
    %81 = arith.addf %79, %80 : vector<16x1xf32>
    %82 = vector.broadcast %81 : vector<16x1xf32> to vector<16x32xf32>
    %83 = arith.divf %73, %82 : vector<16x32xf32>
    %c0_35 = arith.constant 0 : index
    %c0_36 = arith.constant 0 : index
    %84 = vector.load %arg5[%c0_35, %c0_36] : memref<32x64xf32, #tpu.memory_space<vmem>>, vector<32x64xf32>
    %cst_37 = arith.constant dense<0.000000e+00> : vector<16x64xf32>
    %85 = tpu.matmul %83, %84, %cst_37 {dimension_numbers = #tpu.dot_dimension_numbers<[1], [0], [0], [1], [0, 0, 1, 1], [], []>} : vector<16x32xf32>, vector<32x64xf32>, vector<16x64xf32> -> vector<16x64xf32>
    %c0_38 = arith.constant 0 : index
    %c0_39 = arith.constant 0 : index
    %86 = vector.load %arg6[%c0_38, %c0_39] : memref<1x64xf32, #tpu.memory_space<vmem>>, vector<1x64xf32>
    %87 = vector.broadcast %86 : vector<1x64xf32> to vector<16x64xf32>
    %88 = arith.addf %85, %87 : vector<16x64xf32>
    %cst_40 = arith.constant 0.000000e+00 : f32
    %89 = vector.broadcast %cst_40 : f32 to vector<16x64xf32>
    %90 = arith.maximumf %88, %89 : vector<16x64xf32>
    %c0_41 = arith.constant 0 : index
    %c0_42 = arith.constant 0 : index
    %91 = vector.load %arg7[%c0_41, %c0_42] : memref<64x32xf32, #tpu.memory_space<vmem>>, vector<64x32xf32>
    %cst_43 = arith.constant dense<0.000000e+00> : vector<16x32xf32>
    %92 = tpu.matmul %90, %91, %cst_43 {dimension_numbers = #tpu.dot_dimension_numbers<[1], [0], [0], [1], [0, 0, 1, 1], [], []>} : vector<16x64xf32>, vector<64x32xf32>, vector<16x32xf32> -> vector<16x32xf32>
    %c0_44 = arith.constant 0 : index
    %c0_45 = arith.constant 0 : index
    %93 = vector.load %arg8[%c0_44, %c0_45] : memref<1x32xf32, #tpu.memory_space<vmem>>, vector<1x32xf32>
    %94 = vector.broadcast %93 : vector<1x32xf32> to vector<16x32xf32>
    %95 = arith.addf %92, %94 : vector<16x32xf32>
    %96 = arith.addf %67, %95 : vector<16x32xf32>
    %97 = vector.shape_cast %96 : vector<16x32xf32> to vector<2x8x32xf32>
    %c0_46 = arith.constant 0 : index
    %c0_47 = arith.constant 0 : index
    %c0_48 = arith.constant 0 : index
    %98 = vector.load %arg9[%c0_46, %c0_47, %c0_48] : memref<2x8x32xf32, #tpu.memory_space<vmem>>, vector<2x8x32xf32>
    tpu.vector_store %arg9[%c0_46, %c0_47, %c0_48], %97 {strides = array<i32>} : memref<2x8x32xf32, #tpu.memory_space<vmem>>, vector<2x8x32xf32>,
    return
  }
  func.func @transform_0(%arg0: i32) -> (i32, i32, i32) {
    %c0_i32 = arith.constant 0 : i32
    %c0_i32_0 = arith.constant 0 : i32
    %c0_i32_1 = arith.constant 0 : i32
    return %arg0, %c0_i32, %c0_i32_0 : i32, i32, i32
  }
  func.func @transform_1(%arg0: i32) -> (i32, i32) {
    %c0_i32 = arith.constant 0 : i32
    %c0_i32_0 = arith.constant 0 : i32
    %c0_i32_1 = arith.constant 0 : i32
    return %c0_i32, %c0_i32_0 : i32, i32
  }
  func.func @transform_2(%arg0: i32) -> (i32, i32, i32) {
    %c0_i32 = arith.constant 0 : i32
    %c0_i32_0 = arith.constant 0 : i32
    %c0_i32_1 = arith.constant 0 : i32
    %c0_i32_2 = arith.constant 0 : i32
    return %c0_i32, %c0_i32_0, %c0_i32_1 : i32, i32, i32
  }
  func.func @transform_3(%arg0: i32) -> (i32, i32, i32) {
    %c0_i32 = arith.constant 0 : i32
    %c0_i32_0 = arith.constant 0 : i32
    %c0_i32_1 = arith.constant 0 : i32
    %c0_i32_2 = arith.constant 0 : i32
    return %c0_i32, %c0_i32_0, %c0_i32_1 : i32, i32, i32
  }
  func.func @transform_4(%arg0: i32) -> (i32, i32) {
    %c0_i32 = arith.constant 0 : i32
    %c0_i32_0 = arith.constant 0 : i32
    %c0_i32_1 = arith.constant 0 : i32
    return %c0_i32, %c0_i32_0 : i32, i32
  }
  func.func @transform_5(%arg0: i32) -> (i32, i32) {
    %c0_i32 = arith.constant 0 : i32
    %c0_i32_0 = arith.constant 0 : i32
    %c0_i32_1 = arith.constant 0 : i32
    return %c0_i32, %c0_i32_0 : i32, i32
  }
  func.func @transform_6(%arg0: i32) -> (i32, i32) {
    %c0_i32 = arith.constant 0 : i32
    %c0_i32_0 = arith.constant 0 : i32
    %c0_i32_1 = arith.constant 0 : i32
    return %c0_i32, %c0_i32_0 : i32, i32
  }
  func.func @transform_7(%arg0: i32) -> (i32, i32) {
    %c0_i32 = arith.constant 0 : i32
    %c0_i32_0 = arith.constant 0 : i32
    %c0_i32_1 = arith.constant 0 : i32
    return %c0_i32, %c0_i32_0 : i32, i32
  }
  func.func @transform_8(%arg0: i32) -> (i32, i32, i32) {
    %c0_i32 = arith.constant 0 : i32
    %c0_i32_0 = arith.constant 0 : i32
    %c0_i32_1 = arith.constant 0 : i32
    return %arg0, %c0_i32, %c0_i32_0 : i32, i32, i32
  }
}

</mosaic_0001>

<llo_original>
// kernel: tpu_custom_call.1
$region0: #{tpu_custom_call.1}
  #allocation0 [shape = 'u32[]', space=smem, size = 0x4, offset = 0x4, fixed_abs, tag = 'smem constant byte address 0x4 - core index']
  #allocation1 [shape = 'u32[144,128]{1,0:T(1,128)}', space=vmem, size = 0x12000, scoped, tag = 'internal scratch']
  %s0 = inlined_call_operand.vmem [shape: f32[2,8,32], index: 0, kind: input, shape index: {}]
  %s1 = inlined_call_operand.vmem [shape: f32[16,16], index: 1, kind: input, shape index: {}]
  %s2 = inlined_call_operand.vmem [shape: f32[12,32,8], index: 2, kind: input, shape index: {}]
  %s3 = inlined_call_operand.vmem [shape: f32[4,8,32], index: 3, kind: input, shape index: {}]
  %s4 = inlined_call_operand.vmem [shape: f32[32,64], index: 4, kind: input, shape index: {}]
  %s5 = inlined_call_operand.vmem [shape: f32[1,64], index: 5, kind: input, shape index: {}]
  %s6 = inlined_call_operand.vmem [shape: f32[64,32], index: 6, kind: input, shape index: {}]
  %s7 = inlined_call_operand.vmem [shape: f32[1,32], index: 7, kind: input, shape index: {}]
  %s8 = inlined_call_operand.hbm [shape: f32[2,8,32], index: 8, kind: output, shape index: {}]
  %s9 = sld [smem:[#allocation0]]
  $region42: #{tpu_custom_call.1} parent=0
    _
  %s11 = ssub.s32 1, %s9
  %s12 = scalar_select 0, %s11, %s9
  $region1: #{tpu_custom_call.1} parent=0
    #allocation2 [shape = 'u8[8192]{0}', space=vmem, size = 0x2000, scoped, tag = 'output window, operand 0, single buffered']
    #allocation3 [shape = 's32[1]{0}', space=sflag, size = 0x4, scoped, tag = 'scoped memory for tpu_custom_call.1']
    %13 = vsyncpa [#allocation3], 0
    // Predicated region
    $region2: #{tpu_custom_call.1} parent=1 // pred_check
      _
    $region3: #{tpu_custom_call.1} parent=1 // pred_check_branch
      %15 = sbr.rel (0) target = $region5
    $region4: #{tpu_custom_call.1} parent=1 // pred_region
      _
    $region5: #{tpu_custom_call.1} parent=1 // pred_fallthru
      _
    // Predicated region
    $region6: #{tpu_custom_call.1} parent=1 // pred_check
      _
    $region7: #{tpu_custom_call.1} parent=1 // pred_check_branch
      %17 = sbr.rel (0) target = $region9
    $region8: #{tpu_custom_call.1} parent=1 // pred_region
      _
    $region9: #{tpu_custom_call.1} parent=1 // pred_fallthru
      _
    // Predicated region
    $region10: #{tpu_custom_call.1} parent=1 // pred_check
      _
    $region11: #{tpu_custom_call.1} parent=1 // pred_check_branch
      %19 = sbr.rel (0) target = $region13
    $region12: #{tpu_custom_call.1} parent=1 // pred_region
      _
    $region13: #{tpu_custom_call.1} parent=1 // pred_fallthru
      _
    // Predicated region
    $region14: #{tpu_custom_call.1} parent=1 // pred_check
      _
    $region15: #{tpu_custom_call.1} parent=1 // pred_check_branch
      %21 = sbr.rel (0) target = $region17
    $region16: #{tpu_custom_call.1} parent=1 // pred_region
      _
    $region17: #{tpu_custom_call.1} parent=1 // pred_fallthru
      _
    // Predicated region
    $region18: #{tpu_custom_call.1} parent=1 // pred_check
      _
    $region19: #{tpu_custom_call.1} parent=1 // pred_check_branch
      %23 = sbr.rel (0) target = $region21
    $region20: #{tpu_custom_call.1} parent=1 // pred_region
      _
    $region21: #{tpu_custom_call.1} parent=1 // pred_fallthru
      _
    // Predicated region
    $region22: #{tpu_custom_call.1} parent=1 // pred_check
      _
    $region23: #{tpu_custom_call.1} parent=1 // pred_check_branch
      %25 = sbr.rel (0) target = $region25
    $region24: #{tpu_custom_call.1} parent=1 // pred_region
      _
    $region25: #{tpu_custom_call.1} parent=1 // pred_fallthru
      _
    // Predicated region
    $region26: #{tpu_custom_call.1} parent=1 // pred_check
      _
    $region27: #{tpu_custom_call.1} parent=1 // pred_check_branch
      %27 = sbr.rel (0) target = $region29
    $region28: #{tpu_custom_call.1} parent=1 // pred_region
      _
    $region29: #{tpu_custom_call.1} parent=1 // pred_fallthru
      _
    // Predicated region
    $region30: #{tpu_custom_call.1} parent=1 // pred_check
      _
    $region31: #{tpu_custom_call.1} parent=1 // pred_check_branch
      %29 = sbr.rel (0) target = $region33
    $region32: #{tpu_custom_call.1} parent=1 // pred_region
      _
    $region33: #{tpu_custom_call.1} parent=1 // pred_fallthru
      _
    %v30 = vld [vmem:[%s0] sm:$0xff]
    %v31 = vld [vmem:[%s0 + $0x8] sm:$0xff]
    %v32 = vld [vmem:[%s1] sm:$0xff]
    %v33 = vld [vmem:[%s1 + $0x8] sm:$0xff]
    %vm34 = vcmask 261120
    %v35 = vsel %vm34, %v30, 0.0
    %36 = vadd.xlane.f32.xlu0 %v35
    %v37 = vpop.xlane.xlu0 %36
    %v38 = vsel %vm34, %v31, 0.0
    %39 = vadd.xlane.f32.xlu0 %v38
    %v40 = vpop.xlane.xlu0 %39
    %v41 = vrcp.pop 32.0
    %v42 = vmul.f32 %v37, %v41
    %v43 = vmul.f32 %v40, %v41
    %v44 = vsub.f32 %v30, %v42
    %v45 = vsub.f32 %v31, %v43
    %v46 = vmul.f32 %v44, %v44
    %v47 = vmul.f32 %v45, %v45
    %v48 = vsel %vm34, %v46, 0.0
    %49 = vadd.xlane.f32.xlu0 %v48
    %v50 = vpop.xlane.xlu0 %49
    %v51 = vsel %vm34, %v47, 0.0
    %52 = vadd.xlane.f32.xlu0 %v51
    %v53 = vpop.xlane.xlu0 %52
    %v54 = vmul.f32 %v50, 0.032258064
    %v55 = vmul.f32 %v53, 0.032258064
    %v56 = vrsqrt.pop %v54
    %v57 = vmul.f32 %v54, %v56
    %vm58 = vcmp.eq.f32.partialorder %v54, inf
    %v59 = vsel %vm58, %v54, %v57
    %vm60 = vcmp.eq.f32.partialorder %v54, 0.0
    %v61 = vand.u32 %v54, 2147483648
    %v62 = vsel %vm60, %v61, %v59
    %v63 = vrsqrt.pop %v55
    %v64 = vmul.f32 %v55, %v63
    %vm65 = vcmp.eq.f32.partialorder %v55, inf
    %v66 = vsel %vm65, %v55, %v64
    %vm67 = vcmp.eq.f32.partialorder %v55, 0.0
    %v68 = vand.u32 %v55, 2147483648
    %v69 = vsel %vm67, %v68, %v66
    %v70 = vadd.f32 %v62, 1e-06
    %v71 = vadd.f32 %v69, 1e-06
    %v72 = vrcp.pop %v70
    %v73 = vmul.f32 %v44, %v72
    %v74 = vrcp.pop %v71
    %v75 = vmul.f32 %v45, %v74
    %v76 = vld [vmem:[%s2] sm:$0xff]
    %v77 = vld [vmem:[%s2 + $0x8] sm:$0xff]
    %v78 = vld [vmem:[%s2 + $0x10] sm:$0xff]
    %v79 = vld [vmem:[%s2 + $0x18] sm:$0xff]
    %v80 = vld [vmem:[%s2 + $0x20] sm:$0xff]
    %v81 = vld [vmem:[%s2 + $0x28] sm:$0xff]
    %v82 = vld [vmem:[%s2 + $0x30] sm:$0xff]
    %v83 = vld [vmem:[%s2 + $0x38] sm:$0xff]
    %v84 = vld [vmem:[%s2 + $0x40] sm:$0xff]
    %v85 = vld [vmem:[%s2 + $0x48] sm:$0xff]
    %v86 = vld [vmem:[%s2 + $0x50] sm:$0xff]
    %v87 = vld [vmem:[%s2 + $0x58] sm:$0xff]
    %v88 = vld [vmem:[%s2 + $0x60] sm:$0xff]
    %v89 = vld [vmem:[%s2 + $0x68] sm:$0xff]
    %v90 = vld [vmem:[%s2 + $0x70] sm:$0xff]
    %v91 = vld [vmem:[%s2 + $0x78] sm:$0xff]
    %v92 = vld [vmem:[%s2 + $0x80] sm:$0xff]
    %v93 = vld [vmem:[%s2 + $0x88] sm:$0xff]
    %v94 = vld [vmem:[%s2 + $0x90] sm:$0xff]
    %v95 = vld [vmem:[%s2 + $0x98] sm:$0xff]
    %v96 = vld [vmem:[%s2 + $0xa0] sm:$0xff]
    %v97 = vld [vmem:[%s2 + $0xa8] sm:$0xff]
    %v98 = vld [vmem:[%s2 + $0xb0] sm:$0xff]
    %v99 = vld [vmem:[%s2 + $0xb8] sm:$0xff]
    %v100 = vld [vmem:[%s2 + $0xc0] sm:$0xff]
    %v101 = vld [vmem:[%s2 + $0xc8] sm:$0xff]
    %v102 = vld [vmem:[%s2 + $0xd0] sm:$0xff]
    %v103 = vld [vmem:[%s2 + $0xd8] sm:$0xff]
    %v104 = vld [vmem:[%s2 + $0xe0] sm:$0xff]
    %v105 = vld [vmem:[%s2 + $0xe8] sm:$0xff]
    %v106 = vld [vmem:[%s2 + $0xf0] sm:$0xff]
    %v107 = vld [vmem:[%s2 + $0xf8] sm:$0xff]
    %v108 = vld [vmem:[%s2 + $0x100] sm:$0xff]
    %v109 = vld [vmem:[%s2 + $0x108] sm:$0xff]
    %v110 = vld [vmem:[%s2 + $0x110] sm:$0xff]
    %v111 = vld [vmem:[%s2 + $0x118] sm:$0xff]
    %v112 = vld [vmem:[%s2 + $0x120] sm:$0xff]
    %v113 = vld [vmem:[%s2 + $0x128] sm:$0xff]
    %v114 = vld [vmem:[%s2 + $0x130] sm:$0xff]
    %v115 = vld [vmem:[%s2 + $0x138] sm:$0xff]
    %v116 = vld [vmem:[%s2 + $0x140] sm:$0xff]
    %v117 = vld [vmem:[%s2 + $0x148] sm:$0xff]
    %v118 = vld [vmem:[%s2 + $0x150] sm:$0xff]
    %v119 = vld [vmem:[%s2 + $0x158] sm:$0xff]
    %v120 = vld [vmem:[%s2 + $0x160] sm:$0xff]
    %v121 = vld [vmem:[%s2 + $0x168] sm:$0xff]
    %v122 = vld [vmem:[%s2 + $0x170] sm:$0xff]
    %v123 = vld [vmem:[%s2 + $0x178] sm:$0xff]
    %v125 = vsel %vm34, %v73, 0
    %v128 = vsel %vm34, %v75, 0
    %130 = vmatprep.subr.mxu0 0.0
    %131 = vmatpush1.msra.mxu0 %v76
    %132 = vmatprep.subr.mxu0 0.0
    %133 = vmatpush1.msra.mxu0 %v77
    %134 = vmatprep.subr.mxu0 0.0
    %135 = vmatpush1.msra.mxu0 %v78
    %136 = vmatprep.subr.mxu0 0.0
    %137 = vmatpush1.msra.mxu0 %v79
    %138 = vmatprep.subr.mxu0 0.0
    %139 = vmatpush1.msra.mxu0 0.0
    %140 = vmatprep.subr.mxu0 0.0
    %141 = vmatpush1.msra.mxu0 0.0
    %142 = vmatprep.subr.mxu0 0.0
    %143 = vmatpush1.msra.mxu0 0.0
    %144 = vmatprep.subr.mxu0 0.0
    %145 = vmatpush1.msra.mxu0 0.0
    %146 = vmatprep.subr.mxu0 0.0
    %147 = vmatpush1.msra.mxu0 0.0
    %148 = vmatprep.subr.mxu0 0.0
    %149 = vmatpush1.msra.mxu0 0.0
    %150 = vmatprep.subr.mxu0 0.0
    %151 = vmatpush1.msra.mxu0 0.0
    %152 = vmatprep.subr.mxu0 0.0
    %153 = vmatpush1.msra.mxu0 0.0
    %154 = vmatprep.subr.mxu0 0.0
    %155 = vmatpush1.msra.mxu0 0.0
    %156 = vmatprep.subr.mxu0 0.0
    %157 = vmatpush1.msra.mxu0 0.0
    %158 = vmatprep.subr.mxu0 0.0
    %159 = vmatpush1.msra.mxu0 0.0
    %160 = vmatprep.subr.mxu0 0.0
    %161 = vmatpush1.msra.mxu0 0.0
    %162 = vmatprep.subr.mxu0 0.0
    %163 = vmatpush1.msra.mxu0 0.0
    %164 = vmatprep.subr.mxu0 0.0
    %165 = vmatpush1.msra.mxu0 0.0
    %166 = vmatprep.subr.mxu0 0.0
    %167 = vmatpush1.msra.mxu0 0.0
    %168 = vmatprep.subr.mxu0 0.0
    %169 = vmatpush1.msra.mxu0 0.0
    %170 = vmatprep.subr.mxu0 0.0
    %171 = vmatpush1.msra.mxu0 0.0
    %172 = vmatprep.subr.mxu0 0.0
    %173 = vmatpush1.msra.mxu0 0.0
    %174 = vmatprep.subr.mxu0 0.0
    %175 = vmatpush1.msra.mxu0 0.0
    %176 = vmatprep.subr.mxu0 0.0
    %177 = vmatpush1.msra.mxu0 0.0
    %178 = vmatprep.subr.mxu0 0.0
    %179 = vmatpush1.msra.mxu0 0.0
    %180 = vmatprep.subr.mxu0 0.0
    %181 = vmatpush1.msra.mxu0 0.0
    %182 = vmatprep.subr.mxu0 0.0
    %183 = vmatpush1.msra.mxu0 0.0
    %184 = vmatprep.subr.mxu0 0.0
    %185 = vmatpush1.msra.mxu0 0.0
    %186 = vmatprep.subr.mxu0 0.0
    %187 = vmatpush1.msra.mxu0 0.0
    %188 = vmatprep.subr.mxu0 0.0
    %189 = vmatpush1.msra.mxu0 0.0
    %190 = vmatprep.subr.mxu0 0.0
    %191 = vmatpush1.msra.mxu0 0.0
    %192 = vmatprep.subr.mxu0 0.0
    %193 = vmatpush1.msra.mxu0 0.0
    %194 = vmatprep.mubr.f32.mxu0 0.0
    %195 = vmatmul.mubr.f32.gmra.mrb[0].mxu0 %v125
    %v196 = vpop.f32.mrb[0].mxu0
    %v197 = vadd.f32 0.0, %v196
    %v198 = vpop.f32.mrb[0].mxu0
    %199 = vmatprep.mubr.f32.mxu0 0.0
    %200 = vmatmul.mubr.f32.gmra.mrb[0].mxu0 %v128
    %v201 = vpop.f32.mrb[0].mxu0
    %v202 = vadd.f32 0.0, %v201
    %v203 = vpop.f32.mrb[0].mxu0
    %204 = vdwg.mxu0
    %205 = vmatprep.subr.mxu0 0.0
    %206 = vmatpush1.msra.mxu0 %v80
    %207 = vmatprep.subr.mxu0 0.0
    %208 = vmatpush1.msra.mxu0 %v81
    %209 = vmatprep.subr.mxu0 0.0
    %210 = vmatpush1.msra.mxu0 %v82
    %211 = vmatprep.subr.mxu0 0.0
    %212 = vmatpush1.msra.mxu0 %v83
    %213 = vmatprep.subr.mxu0 0.0
    %214 = vmatpush1.msra.mxu0 0.0
    %215 = vmatprep.subr.mxu0 0.0
    %216 = vmatpush1.msra.mxu0 0.0
    %217 = vmatprep.subr.mxu0 0.0
    %218 = vmatpush1.msra.mxu0 0.0
    %219 = vmatprep.subr.mxu0 0.0
    %220 = vmatpush1.msra.mxu0 0.0
    %221 = vmatprep.subr.mxu0 0.0
    %222 = vmatpush1.msra.mxu0 0.0
    %223 = vmatprep.subr.mxu0 0.0
    %224 = vmatpush1.msra.mxu0 0.0
    %225 = vmatprep.subr.mxu0 0.0
    %226 = vmatpush1.msra.mxu0 0.0
    %227 = vmatprep.subr.mxu0 0.0
    %228 = vmatpush1.msra.mxu0 0.0
    %229 = vmatprep.subr.mxu0 0.0
    %230 = vmatpush1.msra.mxu0 0.0
    %231 = vmatprep.subr.mxu0 0.0
    %232 = vmatpush1.msra.mxu0 0.0
    %233 = vmatprep.subr.mxu0 0.0
    %234 = vmatpush1.msra.mxu0 0.0
    %235 = vmatprep.subr.mxu0 0.0
    %236 = vmatpush1.msra.mxu0 0.0
    %237 = vmatprep.subr.mxu0 0.0
    %238 = vmatpush1.msra.mxu0 0.0
    %239 = vmatprep.subr.mxu0 0.0
    %240 = vmatpush1.msra.mxu0 0.0
    %241 = vmatprep.subr.mxu0 0.0
    %242 = vmatpush1.msra.mxu0 0.0
    %243 = vmatprep.subr.mxu0 0.0
    %244 = vmatpush1.msra.mxu0 0.0
    %245 = vmatprep.subr.mxu0 0.0
    %246 = vmatpush1.msra.mxu0 0.0
    %247 = vmatprep.subr.mxu0 0.0
    %248 = vmatpush1.msra.mxu0 0.0
    %249 = vmatprep.subr.mxu0 0.0
    %250 = vmatpush1.msra.mxu0 0.0
    %251 = vmatprep.subr.mxu0 0.0
    %252 = vmatpush1.msra.mxu0 0.0
    %253 = vmatprep.subr.mxu0 0.0
    %254 = vmatpush1.msra.mxu0 0.0
    %255 = vmatprep.subr.mxu0 0.0
    %256 = vmatpush1.msra.mxu0 0.0
    %257 = vmatprep.subr.mxu0 0.0
    %258 = vmatpush1.msra.mxu0 0.0
    %259 = vmatprep.subr.mxu0 0.0
    %260 = vmatpush1.msra.mxu0 0.0
    %261 = vmatprep.subr.mxu0 0.0
    %262 = vmatpush1.msra.mxu0 0.0
    %263 = vmatprep.subr.mxu0 0.0
    %264 = vmatpush1.msra.mxu0 0.0
    %265 = vmatprep.subr.mxu0 0.0
    %266 = vmatpush1.msra.mxu0 0.0
    %267 = vmatprep.subr.mxu0 0.0
    %268 = vmatpush1.msra.mxu0 0.0
    %269 = vmatprep.mubr.f32.mxu0 0.0
    %270 = vmatmul.mubr.f32.gmra.mrb[0].mxu0 %v125
    %v271 = vpop.f32.mrb[0].mxu0
    %v272 = vadd.f32 0.0, %v271
    %v273 = vpop.f32.mrb[0].mxu0
    %274 = vmatprep.mubr.f32.mxu0 0.0
    %275 = vmatmul.mubr.f32.gmra.mrb[0].mxu0 %v128
    %v276 = vpop.f32.mrb[0].mxu0
    %v277 = vadd.f32 0.0, %v276
    %v278 = vpop.f32.mrb[0].mxu0
    %279 = vdwg.mxu0
    %280 = vmatprep.subr.mxu0 0.0
    %281 = vmatpush1.msra.mxu0 %v84
    %282 = vmatprep.subr.mxu0 0.0
    %283 = vmatpush1.msra.mxu0 %v85
    %284 = vmatprep.subr.mxu0 0.0
    %285 = vmatpush1.msra.mxu0 %v86
    %286 = vmatprep.subr.mxu0 0.0
    %287 = vmatpush1.msra.mxu0 %v87
    %288 = vmatprep.subr.mxu0 0.0
    %289 = vmatpush1.msra.mxu0 0.0
    %290 = vmatprep.subr.mxu0 0.0
    %291 = vmatpush1.msra.mxu0 0.0
    %292 = vmatprep.subr.mxu0 0.0
    %293 = vmatpush1.msra.mxu0 0.0
    %294 = vmatprep.subr.mxu0 0.0
    %295 = vmatpush1.msra.mxu0 0.0
    %296 = vmatprep.subr.mxu0 0.0
    %297 = vmatpush1.msra.mxu0 0.0
    %298 = vmatprep.subr.mxu0 0.0
    %299 = vmatpush1.msra.mxu0 0.0
    %300 = vmatprep.subr.mxu0 0.0
    %301 = vmatpush1.msra.mxu0 0.0
    %302 = vmatprep.subr.mxu0 0.0
    %303 = vmatpush1.msra.mxu0 0.0
    %304 = vmatprep.subr.mxu0 0.0
    %305 = vmatpush1.msra.mxu0 0.0
    %306 = vmatprep.subr.mxu0 0.0
    %307 = vmatpush1.msra.mxu0 0.0
    %308 = vmatprep.subr.mxu0 0.0
    %309 = vmatpush1.msra.mxu0 0.0
    %310 = vmatprep.subr.mxu0 0.0
    %311 = vmatpush1.msra.mxu0 0.0
    %312 = vmatprep.subr.mxu0 0.0
    %313 = vmatpush1.msra.mxu0 0.0
    %314 = vmatprep.subr.mxu0 0.0
    %315 = vmatpush1.msra.mxu0 0.0
    %316 = vmatprep.subr.mxu0 0.0
    %317 = vmatpush1.msra.mxu0 0.0
    %318 = vmatprep.subr.mxu0 0.0
    %319 = vmatpush1.msra.mxu0 0.0
    %320 = vmatprep.subr.mxu0 0.0
    %321 = vmatpush1.msra.mxu0 0.0
    %322 = vmatprep.subr.mxu0 0.0
    %323 = vmatpush1.msra.mxu0 0.0
    %324 = vmatprep.subr.mxu0 0.0
    %325 = vmatpush1.msra.mxu0 0.0
    %326 = vmatprep.subr.mxu0 0.0
    %327 = vmatpush1.msra.mxu0 0.0
    %328 = vmatprep.subr.mxu0 0.0
    %329 = vmatpush1.msra.mxu0 0.0
    %330 = vmatprep.subr.mxu0 0.0
    %331 = vmatpush1.msra.mxu0 0.0
    %332 = vmatprep.subr.mxu0 0.0
    %333 = vmatpush1.msra.mxu0 0.0
    %334 = vmatprep.subr.mxu0 0.0
    %335 = vmatpush1.msra.mxu0 0.0
    %336 = vmatprep.subr.mxu0 0.0
    %337 = vmatpush1.msra.mxu0 0.0
    %338 = vmatprep.subr.mxu0 0.0
    %339 = vmatpush1.msra.mxu0 0.0
    %340 = vmatprep.subr.mxu0 0.0
    %341 = vmatpush1.msra.mxu0 0.0
    %342 = vmatprep.subr.mxu0 0.0
    %343 = vmatpush1.msra.mxu0 0.0
    %344 = vmatprep.mubr.f32.mxu0 0.0
    %345 = vmatmul.mubr.f32.gmra.mrb[0].mxu0 %v125
    %v346 = vpop.f32.mrb[0].mxu0
    %v347 = vadd.f32 0.0, %v346
    %v348 = vpop.f32.mrb[0].mxu0
    %349 = vmatprep.mubr.f32.mxu0 0.0
    %350 = vmatmul.mubr.f32.gmra.mrb[0].mxu0 %v128
    %v351 = vpop.f32.mrb[0].mxu0
    %v352 = vadd.f32 0.0, %v351
    %v353 = vpop.f32.mrb[0].mxu0
    %354 = vdwg.mxu0
    %355 = vmatprep.subr.mxu0 0.0
    %356 = vmatpush1.msra.mxu0 %v88
    %357 = vmatprep.subr.mxu0 0.0
    %358 = vmatpush1.msra.mxu0 %v89
    %359 = vmatprep.subr.mxu0 0.0
    %360 = vmatpush1.msra.mxu0 %v90
    %361 = vmatprep.subr.mxu0 0.0
    %362 = vmatpush1.msra.mxu0 %v91
    %363 = vmatprep.subr.mxu0 0.0
    %364 = vmatpush1.msra.mxu0 0.0
    %365 = vmatprep.subr.mxu0 0.0
    %366 = vmatpush1.msra.mxu0 0.0
    %367 = vmatprep.subr.mxu0 0.0
    %368 = vmatpush1.msra.mxu0 0.0
    %369 = vmatprep.subr.mxu0 0.0
    %370 = vmatpush1.msra.mxu0 0.0
    %371 = vmatprep.subr.mxu0 0.0
    %372 = vmatpush1.msra.mxu0 0.0
    %373 = vmatprep.subr.mxu0 0.0
    %374 = vmatpush1.msra.mxu0 0.0
    %375 = vmatprep.subr.mxu0 0.0
    %376 = vmatpush1.msra.mxu0 0.0
    %377 = vmatprep.subr.mxu0 0.0
    %378 = vmatpush1.msra.mxu0 0.0
    %379 = vmatprep.subr.mxu0 0.0
    %380 = vmatpush1.msra.mxu0 0.0
    %381 = vmatprep.subr.mxu0 0.0
    %382 = vmatpush1.msra.mxu0 0.0
    %383 = vmatprep.subr.mxu0 0.0
    %384 = vmatpush1.msra.mxu0 0.0
    %385 = vmatprep.subr.mxu0 0.0
    %386 = vmatpush1.msra.mxu0 0.0
    %387 = vmatprep.subr.mxu0 0.0
    %388 = vmatpush1.msra.mxu0 0.0
    %389 = vmatprep.subr.mxu0 0.0
    %390 = vmatpush1.msra.mxu0 0.0
    %391 = vmatprep.subr.mxu0 0.0
    %392 = vmatpush1.msra.mxu0 0.0
    %393 = vmatprep.subr.mxu0 0.0
    %394 = vmatpush1.msra.mxu0 0.0
    %395 = vmatprep.subr.mxu0 0.0
    %396 = vmatpush1.msra.mxu0 0.0
    %397 = vmatprep.subr.mxu0 0.0
    %398 = vmatpush1.msra.mxu0 0.0
    %399 = vmatprep.subr.mxu0 0.0
    %400 = vmatpush1.msra.mxu0 0.0
    %401 = vmatprep.subr.mxu0 0.0
    %402 = vmatpush1.msra.mxu0 0.0
    %403 = vmatprep.subr.mxu0 0.0
    %404 = vmatpush1.msra.mxu0 0.0
    %405 = vmatprep.subr.mxu0 0.0
    %406 = vmatpush1.msra.mxu0 0.0
    %407 = vmatprep.subr.mxu0 0.0
    %408 = vmatpush1.msra.mxu0 0.0
    %409 = vmatprep.subr.mxu0 0.0
    %410 = vmatpush1.msra.mxu0 0.0
    %411 = vmatprep.subr.mxu0 0.0
    %412 = vmatpush1.msra.mxu0 0.0
    %413 = vmatprep.subr.mxu0 0.0
    %414 = vmatpush1.msra.mxu0 0.0
    %415 = vmatprep.subr.mxu0 0.0
    %416 = vmatpush1.msra.mxu0 0.0
    %417 = vmatprep.subr.mxu0 0.0
    %418 = vmatpush1.msra.mxu0 0.0
    %419 = vmatprep.mubr.f32.mxu0 0.0
    %420 = vmatmul.mubr.f32.gmra.mrb[0].mxu0 %v125
    %v421 = vpop.f32.mrb[0].mxu0
    %v422 = vadd.f32 0.0, %v421
    %v423 = vpop.f32.mrb[0].mxu0
    %424 = vmatprep.mubr.f32.mxu0 0.0
    %425 = vmatmul.mubr.f32.gmra.mrb[0].mxu0 %v128
    %v426 = vpop.f32.mrb[0].mxu0
    %v427 = vadd.f32 0.0, %v426
    %v428 = vpop.f32.mrb[0].mxu0
    %429 = vdwg.mxu0
    %430 = vmatprep.subr.mxu0 0.0
    %431 = vmatpush1.msra.mxu0 %v92
    %432 = vmatprep.subr.mxu0 0.0
    %433 = vmatpush1.msra.mxu0 %v93
    %434 = vmatprep.subr.mxu0 0.0
    %435 = vmatpush1.msra.mxu0 %v94
    %436 = vmatprep.subr.mxu0 0.0
    %437 = vmatpush1.msra.mxu0 %v95
    %438 = vmatprep.subr.mxu0 0.0
    %439 = vmatpush1.msra.mxu0 0.0
    %440 = vmatprep.subr.mxu0 0.0
    %441 = vmatpush1.msra.mxu0 0.0
    %442 = vmatprep.subr.mxu0 0.0
    %443 = vmatpush1.msra.mxu0 0.0
    %444 = vmatprep.subr.mxu0 0.0
    %445 = vmatpush1.msra.mxu0 0.0
    %446 = vmatprep.subr.mxu0 0.0
    %447 = vmatpush1.msra.mxu0 0.0
    %448 = vmatprep.subr.mxu0 0.0
    %449 = vmatpush1.msra.mxu0 0.0
    %450 = vmatprep.subr.mxu0 0.0
    %451 = vmatpush1.msra.mxu0 0.0
    %452 = vmatprep.subr.mxu0 0.0
    %453 = vmatpush1.msra.mxu0 0.0
    %454 = vmatprep.subr.mxu0 0.0
    %455 = vmatpush1.msra.mxu0 0.0
    %456 = vmatprep.subr.mxu0 0.0
    %457 = vmatpush1.msra.mxu0 0.0
    %458 = vmatprep.subr.mxu0 0.0
    %459 = vmatpush1.msra.mxu0 0.0
    %460 = vmatprep.subr.mxu0 0.0
    %461 = vmatpush1.msra.mxu0 0.0
    %462 = vmatprep.subr.mxu0 0.0
    %463 = vmatpush1.msra.mxu0 0.0
    %464 = vmatprep.subr.mxu0 0.0
    %465 = vmatpush1.msra.mxu0 0.0
    %466 = vmatprep.subr.mxu0 0.0
    %467 = vmatpush1.msra.mxu0 0.0
    %468 = vmatprep.subr.mxu0 0.0
    %469 = vmatpush1.msra.mxu0 0.0
    %470 = vmatprep.subr.mxu0 0.0
    %471 = vmatpush1.msra.mxu0 0.0
    %472 = vmatprep.subr.mxu0 0.0
    %473 = vmatpush1.msra.mxu0 0.0
    %474 = vmatprep.subr.mxu0 0.0
    %475 = vmatpush1.msra.mxu0 0.0
    %476 = vmatprep.subr.mxu0 0.0
    %477 = vmatpush1.msra.mxu0 0.0
    %478 = vmatprep.subr.mxu0 0.0
    %479 = vmatpush1.msra.mxu0 0.0
    %480 = vmatprep.subr.mxu0 0.0
    %481 = vmatpush1.msra.mxu0 0.0
    %482 = vmatprep.subr.mxu0 0.0
    %483 = vmatpush1.msra.mxu0 0.0
    %484 = vmatprep.subr.mxu0 0.0
    %485 = vmatpush1.msra.mxu0 0.0
    %486 = vmatprep.subr.mxu0 0.0
    %487 = vmatpush1.msra.mxu0 0.0
    %488 = vmatprep.subr.mxu0 0.0
    %489 = vmatpush1.msra.mxu0 0.0
    %490 = vmatprep.subr.mxu0 0.0
    %491 = vmatpush1.msra.mxu0 0.0
    %492 = vmatprep.subr.mxu0 0.0
    %493 = vmatpush1.msra.mxu0 0.0
    %494 = vmatprep.mubr.f32.mxu0 0.0
    %495 = vmatmul.mubr.f32.gmra.mrb[0].mxu0 %v125
    %v496 = vpop.f32.mrb[0].mxu0
    %v497 = vadd.f32 0.0, %v496
    %v498 = vpop.f32.mrb[0].mxu0
    %499 = vmatprep.mubr.f32.mxu0 0.0
    %500 = vmatmul.mubr.f32.gmra.mrb[0].mxu0 %v128
    %v501 = vpop.f32.mrb[0].mxu0
    %v502 = vadd.f32 0.0, %v501
    %v503 = vpop.f32.mrb[0].mxu0
    %504 = vdwg.mxu0
    %505 = vmatprep.subr.mxu0 0.0
    %506 = vmatpush1.msra.mxu0 %v96
    %507 = vmatprep.subr.mxu0 0.0
    %508 = vmatpush1.msra.mxu0 %v97
    %509 = vmatprep.subr.mxu0 0.0
    %510 = vmatpush1.msra.mxu0 %v98
    %511 = vmatprep.subr.mxu0 0.0
    %512 = vmatpush1.msra.mxu0 %v99
    %513 = vmatprep.subr.mxu0 0.0
    %514 = vmatpush1.msra.mxu0 0.0
    %515 = vmatprep.subr.mxu0 0.0
    %516 = vmatpush1.msra.mxu0 0.0
    %517 = vmatprep.subr.mxu0 0.0
    %518 = vmatpush1.msra.mxu0 0.0
    %519 = vmatprep.subr.mxu0 0.0
    %520 = vmatpush1.msra.mxu0 0.0
    %521 = vmatprep.subr.mxu0 0.0
    %522 = vmatpush1.msra.mxu0 0.0
    %523 = vmatprep.subr.mxu0 0.0
    %524 = vmatpush1.msra.mxu0 0.0
    %525 = vmatprep.subr.mxu0 0.0
    %526 = vmatpush1.msra.mxu0 0.0
    %527 = vmatprep.subr.mxu0 0.0
    %528 = vmatpush1.msra.mxu0 0.0
    %529 = vmatprep.subr.mxu0 0.0
    %530 = vmatpush1.msra.mxu0 0.0
    %531 = vmatprep.subr.mxu0 0.0
    %532 = vmatpush1.msra.mxu0 0.0
    %533 = vmatprep.subr.mxu0 0.0
    %534 = vmatpush1.msra.mxu0 0.0
    %535 = vmatprep.subr.mxu0 0.0
    %536 = vmatpush1.msra.mxu0 0.0
    %537 = vmatprep.subr.mxu0 0.0
    %538 = vmatpush1.msra.mxu0 0.0
    %539 = vmatprep.subr.mxu0 0.0
    %540 = vmatpush1.msra.mxu0 0.0
    %541 = vmatprep.subr.mxu0 0.0
    %542 = vmatpush1.msra.mxu0 0.0
    %543 = vmatprep.subr.mxu0 0.0
    %544 = vmatpush1.msra.mxu0 0.0
    %545 = vmatprep.subr.mxu0 0.0
    %546 = vmatpush1.msra.mxu0 0.0
    %547 = vmatprep.subr.mxu0 0.0
    %548 = vmatpush1.msra.mxu0 0.0
    %549 = vmatprep.subr.mxu0 0.0
    %550 = vmatpush1.msra.mxu0 0.0
    %551 = vmatprep.subr.mxu0 0.0
    %552 = vmatpush1.msra.mxu0 0.0
    %553 = vmatprep.subr.mxu0 0.0
    %554 = vmatpush1.msra.mxu0 0.0
    %555 = vmatprep.subr.mxu0 0.0
    %556 = vmatpush1.msra.mxu0 0.0
    %557 = vmatprep.subr.mxu0 0.0
    %558 = vmatpush1.msra.mxu0 0.0
    %559 = vmatprep.subr.mxu0 0.0
    %560 = vmatpush1.msra.mxu0 0.0
    %561 = vmatprep.subr.mxu0 0.0
    %562 = vmatpush1.msra.mxu0 0.0
    %563 = vmatprep.subr.mxu0 0.0
    %564 = vmatpush1.msra.mxu0 0.0
    %565 = vmatprep.subr.mxu0 0.0
    %566 = vmatpush1.msra.mxu0 0.0
    %567 = vmatprep.subr.mxu0 0.0
    %568 = vmatpush1.msra.mxu0 0.0
    %569 = vmatprep.mubr.f32.mxu0 0.0
    %570 = vmatmul.mubr.f32.gmra.mrb[0].mxu0 %v125
    %v571 = vpop.f32.mrb[0].mxu0
    %v572 = vadd.f32 0.0, %v571
    %v573 = vpop.f32.mrb[0].mxu0
    %574 = vmatprep.mubr.f32.mxu0 0.0
    %575 = vmatmul.mubr.f32.gmra.mrb[0].mxu0 %v128
    %v576 = vpop.f32.mrb[0].mxu0
    %v577 = vadd.f32 0.0, %v576
    %v578 = vpop.f32.mrb[0].mxu0
    %579 = vdwg.mxu0
    %580 = vmatprep.subr.mxu0 0.0
    %581 = vmatpush1.msra.mxu0 %v100
    %582 = vmatprep.subr.mxu0 0.0
    %583 = vmatpush1.msra.mxu0 %v101
    %584 = vmatprep.subr.mxu0 0.0
    %585 = vmatpush1.msra.mxu0 %v102
    %586 = vmatprep.subr.mxu0 0.0
    %587 = vmatpush1.msra.mxu0 %v103
    %588 = vmatprep.subr.mxu0 0.0
    %589 = vmatpush1.msra.mxu0 0.0
    %590 = vmatprep.subr.mxu0 0.0
    %591 = vmatpush1.msra.mxu0 0.0
    %592 = vmatprep.subr.mxu0 0.0
    %593 = vmatpush1.msra.mxu0 0.0
    %594 = vmatprep.subr.mxu0 0.0
    %595 = vmatpush1.msra.mxu0 0.0
    %596 = vmatprep.subr.mxu0 0.0
    %597 = vmatpush1.msra.mxu0 0.0
    %598 = vmatprep.subr.mxu0 0.0
    %599 = vmatpush1.msra.mxu0 0.0
    %600 = vmatprep.subr.mxu0 0.0
    %601 = vmatpush1.msra.mxu0 0.0
    %602 = vmatprep.subr.mxu0 0.0
    %603 = vmatpush1.msra.mxu0 0.0
    %604 = vmatprep.subr.mxu0 0.0
    %605 = vmatpush1.msra.mxu0 0.0
    %606 = vmatprep.subr.mxu0 0.0
    %607 = vmatpush1.msra.mxu0 0.0
    %608 = vmatprep.subr.mxu0 0.0
    %609 = vmatpush1.msra.mxu0 0.0
    %610 = vmatprep.subr.mxu0 0.0
    %611 = vmatpush1.msra.mxu0 0.0
    %612 = vmatprep.subr.mxu0 0.0
    %613 = vmatpush1.msra.mxu0 0.0
    %614 = vmatprep.subr.mxu0 0.0
    %615 = vmatpush1.msra.mxu0 0.0
    %616 = vmatprep.subr.mxu0 0.0
    %617 = vmatpush1.msra.mxu0 0.0
    %618 = vmatprep.subr.mxu0 0.0
    %619 = vmatpush1.msra.mxu0 0.0
    %620 = vmatprep.subr.mxu0 0.0
    %621 = vmatpush1.msra.mxu0 0.0
    %622 = vmatprep.subr.mxu0 0.0
    %623 = vmatpush1.msra.mxu0 0.0
    %624 = vmatprep.subr.mxu0 0.0
    %625 = vmatpush1.msra.mxu0 0.0
    %626 = vmatprep.subr.mxu0 0.0
    %627 = vmatpush1.msra.mxu0 0.0
    %628 = vmatprep.subr.mxu0 0.0
    %629 = vmatpush1.msra.mxu0 0.0
    %630 = vmatprep.subr.mxu0 0.0
    %631 = vmatpush1.msra.mxu0 0.0
    %632 = vmatprep.subr.mxu0 0.0
    %633 = vmatpush1.msra.mxu0 0.0
    %634 = vmatprep.subr.mxu0 0.0
    %635 = vmatpush1.msra.mxu0 0.0
    %636 = vmatprep.subr.mxu0 0.0
    %637 = vmatpush1.msra.mxu0 0.0
    %638 = vmatprep.subr.mxu0 0.0
    %639 = vmatpush1.msra.mxu0 0.0
    %640 = vmatprep.subr.mxu0 0.0
    %641 = vmatpush1.msra.mxu0 0.0
    %642 = vmatprep.subr.mxu0 0.0
    %643 = vmatpush1.msra.mxu0 0.0
    %644 = vmatprep.mubr.f32.mxu0 0.0
    %645 = vmatmul.mubr.f32.gmra.mrb[0].mxu0 %v125
    %v646 = vpop.f32.mrb[0].mxu0
    %v647 = vadd.f32 0.0, %v646
    %v648 = vpop.f32.mrb[0].mxu0
    %649 = vmatprep.mubr.f32.mxu0 0.0
    %650 = vmatmul.mubr.f32.gmra.mrb[0].mxu0 %v128
    %v651 = vpop.f32.mrb[0].mxu0
    %v652 = vadd.f32 0.0, %v651
    %v653 = vpop.f32.mrb[0].mxu0
    %654 = vdwg.mxu0
    %655 = vmatprep.subr.mxu0 0.0
    %656 = vmatpush1.msra.mxu0 %v104
    %657 = vmatprep.subr.mxu0 0.0
    %658 = vmatpush1.msra.mxu0 %v105
    %659 = vmatprep.subr.mxu0 0.0
    %660 = vmatpush1.msra.mxu0 %v106
    %661 = vmatprep.subr.mxu0 0.0
    %662 = vmatpush1.msra.mxu0 %v107
    %663 = vmatprep.subr.mxu0 0.0
    %664 = vmatpush1.msra.mxu0 0.0
    %665 = vmatprep.subr.mxu0 0.0
    %666 = vmatpush1.msra.mxu0 0.0
    %667 = vmatprep.subr.mxu0 0.0
    %668 = vmatpush1.msra.mxu0 0.0
    %669 = vmatprep.subr.mxu0 0.0
    %670 = vmatpush1.msra.mxu0 0.0
    %671 = vmatprep.subr.mxu0 0.0
    %672 = vmatpush1.msra.mxu0 0.0
    %673 = vmatprep.subr.mxu0 0.0
    %674 = vmatpush1.msra.mxu0 0.0
    %675 = vmatprep.subr.mxu0 0.0
    %676 = vmatpush1.msra.mxu0 0.0
    %677 = vmatprep.subr.mxu0 0.0
    %678 = vmatpush1.msra.mxu0 0.0
    %679 = vmatprep.subr.mxu0 0.0
    %680 = vmatpush1.msra.mxu0 0.0
    %681 = vmatprep.subr.mxu0 0.0
    %682 = vmatpush1.msra.mxu0 0.0
    %683 = vmatprep.subr.mxu0 0.0
    %684 = vmatpush1.msra.mxu0 0.0
    %685 = vmatprep.subr.mxu0 0.0
    %686 = vmatpush1.msra.mxu0 0.0
    %687 = vmatprep.subr.mxu0 0.0
    %688 = vmatpush1.msra.mxu0 0.0
    %689 = vmatprep.subr.mxu0 0.0
    %690 = vmatpush1.msra.mxu0 0.0
    %691 = vmatprep.subr.mxu0 0.0
    %692 = vmatpush1.msra.mxu0 0.0
    %693 = vmatprep.subr.mxu0 0.0
    %694 = vmatpush1.msra.mxu0 0.0
    %695 = vmatprep.subr.mxu0 0.0
    %696 = vmatpush1.msra.mxu0 0.0
    %697 = vmatprep.subr.mxu0 0.0
    %698 = vmatpush1.msra.mxu0 0.0
    %699 = vmatprep.subr.mxu0 0.0
    %700 = vmatpush1.msra.mxu0 0.0
    %701 = vmatprep.subr.mxu0 0.0
    %702 = vmatpush1.msra.mxu0 0.0
    %703 = vmatprep.subr.mxu0 0.0
    %704 = vmatpush1.msra.mxu0 0.0
    %705 = vmatprep.subr.mxu0 0.0
    %706 = vmatpush1.msra.mxu0 0.0
    %707 = vmatprep.subr.mxu0 0.0
    %708 = vmatpush1.msra.mxu0 0.0
    %709 = vmatprep.subr.mxu0 0.0
    %710 = vmatpush1.msra.mxu0 0.0
    %711 = vmatprep.subr.mxu0 0.0
    %712 = vmatpush1.msra.mxu0 0.0
    %713 = vmatprep.subr.mxu0 0.0
    %714 = vmatpush1.msra.mxu0 0.0
    %715 = vmatprep.subr.mxu0 0.0
    %716 = vmatpush1.msra.mxu0 0.0
    %717 = vmatprep.subr.mxu0 0.0
    %718 = vmatpush1.msra.mxu0 0.0
    %719 = vmatprep.mubr.f32.mxu0 0.0
    %720 = vmatmul.mubr.f32.gmra.mrb[0].mxu0 %v125
    %v721 = vpop.f32.mrb[0].mxu0
    %v722 = vadd.f32 0.0, %v721
    %v723 = vpop.f32.mrb[0].mxu0
    %724 = vmatprep.mubr.f32.mxu0 0.0
    %725 = vmatmul.mubr.f32.gmra.mrb[0].mxu0 %v128
    %v726 = vpop.f32.mrb[0].mxu0
    %v727 = vadd.f32 0.0, %v726
    %v728 = vpop.f32.mrb[0].mxu0
    %729 = vdwg.mxu0
    %730 = vmatprep.subr.mxu0 0.0
    %731 = vmatpush1.msra.mxu0 %v108
    %732 = vmatprep.subr.mxu0 0.0
    %733 = vmatpush1.msra.mxu0 %v109
    %734 = vmatprep.subr.mxu0 0.0
    %735 = vmatpush1.msra.mxu0 %v110
    %736 = vmatprep.subr.mxu0 0.0
    %737 = vmatpush1.msra.mxu0 %v111
    %738 = vmatprep.subr.mxu0 0.0
    %739 = vmatpush1.msra.mxu0 0.0
    %740 = vmatprep.subr.mxu0 0.0
    %741 = vmatpush1.msra.mxu0 0.0
    %742 = vmatprep.subr.mxu0 0.0
    %743 = vmatpush1.msra.mxu0 0.0
    %744 = vmatprep.subr.mxu0 0.0
    %745 = vmatpush1.msra.mxu0 0.0
    %746 = vmatprep.subr.mxu0 0.0
    %747 = vmatpush1.msra.mxu0 0.0
    %748 = vmatprep.subr.mxu0 0.0
    %749 = vmatpush1.msra.mxu0 0.0
    %750 = vmatprep.subr.mxu0 0.0
    %751 = vmatpush1.msra.mxu0 0.0
    %752 = vmatprep.subr.mxu0 0.0
    %753 = vmatpush1.msra.mxu0 0.0
    %754 = vmatprep.subr.mxu0 0.0
    %755 = vmatpush1.msra.mxu0 0.0
    %756 = vmatprep.subr.mxu0 0.0
    %757 = vmatpush1.msra.mxu0 0.0
    %758 = vmatprep.subr.mxu0 0.0
    %759 = vmatpush1.msra.mxu0 0.0
    %760 = vmatprep.subr.mxu0 0.0
    %761 = vmatpush1.msra.mxu0 0.0
    %762 = vmatprep.subr.mxu0 0.0
    %763 = vmatpush1.msra.mxu0 0.0
    %764 = vmatprep.subr.mxu0 0.0
    %765 = vmatpush1.msra.mxu0 0.0
    %766 = vmatprep.subr.mxu0 0.0
    %767 = vmatpush1.msra.mxu0 0.0
    %768 = vmatprep.subr.mxu0 0.0
    %769 = vmatpush1.msra.mxu0 0.0
    %770 = vmatprep.subr.mxu0 0.0
    %771 = vmatpush1.msra.mxu0 0.0
    %772 = vmatprep.subr.mxu0 0.0
    %773 = vmatpush1.msra.mxu0 0.0
    %774 = vmatprep.subr.mxu0 0.0
    %775 = vmatpush1.msra.mxu0 0.0
    %776 = vmatprep.subr.mxu0 0.0
    %777 = vmatpush1.msra.mxu0 0.0
    %778 = vmatprep.subr.mxu0 0.0
    %779 = vmatpush1.msra.mxu0 0.0
    %780 = vmatprep.subr.mxu0 0.0
    %781 = vmatpush1.msra.mxu0 0.0
    %782 = vmatprep.subr.mxu0 0.0
    %783 = vmatpush1.msra.mxu0 0.0
    %784 = vmatprep.subr.mxu0 0.0
    %785 = vmatpush1.msra.mxu0 0.0
    %786 = vmatprep.subr.mxu0 0.0
    %787 = vmatpush1.msra.mxu0 0.0
    %788 = vmatprep.subr.mxu0 0.0
    %789 = vmatpush1.msra.mxu0 0.0
    %790 = vmatprep.subr.mxu0 0.0
    %791 = vmatpush1.msra.mxu0 0.0
    %792 = vmatprep.subr.mxu0 0.0
    %793 = vmatpush1.msra.mxu0 0.0
    %794 = vmatprep.mubr.f32.mxu0 0.0
    %795 = vmatmul.mubr.f32.gmra.mrb[0].mxu0 %v125
    %v796 = vpop.f32.mrb[0].mxu0
    %v797 = vadd.f32 0.0, %v796
    %v798 = vpop.f32.mrb[0].mxu0
    %799 = vmatprep.mubr.f32.mxu0 0.0
    %800 = vmatmul.mubr.f32.gmra.mrb[0].mxu0 %v128
    %v801 = vpop.f32.mrb[0].mxu0
    %v802 = vadd.f32 0.0, %v801
    %v803 = vpop.f32.mrb[0].mxu0
    %804 = vdwg.mxu0
    %805 = vmatprep.subr.mxu0 0.0
    %806 = vmatpush1.msra.mxu0 %v112
    %807 = vmatprep.subr.mxu0 0.0
    %808 = vmatpush1.msra.mxu0 %v113
    %809 = vmatprep.subr.mxu0 0.0
    %810 = vmatpush1.msra.mxu0 %v114
    %811 = vmatprep.subr.mxu0 0.0
    %812 = vmatpush1.msra.mxu0 %v115
    %813 = vmatprep.subr.mxu0 0.0
    %814 = vmatpush1.msra.mxu0 0.0
    %815 = vmatprep.subr.mxu0 0.0
    %816 = vmatpush1.msra.mxu0 0.0
    %817 = vmatprep.subr.mxu0 0.0
    %818 = vmatpush1.msra.mxu0 0.0
    %819 = vmatprep.subr.mxu0 0.0
    %820 = vmatpush1.msra.mxu0 0.0
    %821 = vmatprep.subr.mxu0 0.0
    %822 = vmatpush1.msra.mxu0 0.0
    %823 = vmatprep.subr.mxu0 0.0
    %824 = vmatpush1.msra.mxu0 0.0
    %825 = vmatprep.subr.mxu0 0.0
    %826 = vmatpush1.msra.mxu0 0.0
    %827 = vmatprep.subr.mxu0 0.0
    %828 = vmatpush1.msra.mxu0 0.0
    %829 = vmatprep.subr.mxu0 0.0
    %830 = vmatpush1.msra.mxu0 0.0
    %831 = vmatprep.subr.mxu0 0.0
    %832 = vmatpush1.msra.mxu0 0.0
    %833 = vmatprep.subr.mxu0 0.0
    %834 = vmatpush1.msra.mxu0 0.0
    %835 = vmatprep.subr.mxu0 0.0
    %836 = vmatpush1.msra.mxu0 0.0
    %837 = vmatprep.subr.mxu0 0.0
    %838 = vmatpush1.msra.mxu0 0.0
    %839 = vmatprep.subr.mxu0 0.0
    %840 = vmatpush1.msra.mxu0 0.0
    %841 = vmatprep.subr.mxu0 0.0
    %842 = vmatpush1.msra.mxu0 0.0
    %843 = vmatprep.subr.mxu0 0.0
    %844 = vmatpush1.msra.mxu0 0.0
    %845 = vmatprep.subr.mxu0 0.0
    %846 = vmatpush1.msra.mxu0 0.0
    %847 = vmatprep.subr.mxu0 0.0
    %848 = vmatpush1.msra.mxu0 0.0
    %849 = vmatprep.subr.mxu0 0.0
    %850 = vmatpush1.msra.mxu0 0.0
    %851 = vmatprep.subr.mxu0 0.0
    %852 = vmatpush1.msra.mxu0 0.0
    %853 = vmatprep.subr.mxu0 0.0
    %854 = vmatpush1.msra.mxu0 0.0
    %855 = vmatprep.subr.mxu0 0.0
    %856 = vmatpush1.msra.mxu0 0.0
    %857 = vmatprep.subr.mxu0 0.0
    %858 = vmatpush1.msra.mxu0 0.0
    %859 = vmatprep.subr.mxu0 0.0
    %860 = vmatpush1.msra.mxu0 0.0
    %861 = vmatprep.subr.mxu0 0.0
    %862 = vmatpush1.msra.mxu0 0.0
    %863 = vmatprep.subr.mxu0 0.0
    %864 = vmatpush1.msra.mxu0 0.0
    %865 = vmatprep.subr.mxu0 0.0
    %866 = vmatpush1.msra.mxu0 0.0
    %867 = vmatprep.subr.mxu0 0.0
    %868 = vmatpush1.msra.mxu0 0.0
    %869 = vmatprep.mubr.f32.mxu0 0.0
    %870 = vmatmul.mubr.f32.gmra.mrb[0].mxu0 %v125
    %v871 = vpop.f32.mrb[0].mxu0
    %v872 = vadd.f32 0.0, %v871
    %v873 = vpop.f32.mrb[0].mxu0
    %874 = vmatprep.mubr.f32.mxu0 0.0
    %875 = vmatmul.mubr.f32.gmra.mrb[0].mxu0 %v128
    %v876 = vpop.f32.mrb[0].mxu0
    %v877 = vadd.f32 0.0, %v876
    %v878 = vpop.f32.mrb[0].mxu0
    %879 = vdwg.mxu0
    %880 = vmatprep.subr.mxu0 0.0
    %881 = vmatpush1.msra.mxu0 %v116
    %882 = vmatprep.subr.mxu0 0.0
    %883 = vmatpush1.msra.mxu0 %v117
    %884 = vmatprep.subr.mxu0 0.0
    %885 = vmatpush1.msra.mxu0 %v118
    %886 = vmatprep.subr.mxu0 0.0
    %887 = vmatpush1.msra.mxu0 %v119
    %888 = vmatprep.subr.mxu0 0.0
    %889 = vmatpush1.msra.mxu0 0.0
    %890 = vmatprep.subr.mxu0 0.0
    %891 = vmatpush1.msra.mxu0 0.0
    %892 = vmatprep.subr.mxu0 0.0
    %893 = vmatpush1.msra.mxu0 0.0
    %894 = vmatprep.subr.mxu0 0.0
    %895 = vmatpush1.msra.mxu0 0.0
    %896 = vmatprep.subr.mxu0 0.0
    %897 = vmatpush1.msra.mxu0 0.0
    %898 = vmatprep.subr.mxu0 0.0
    %899 = vmatpush1.msra.mxu0 0.0
    %900 = vmatprep.subr.mxu0 0.0
    %901 = vmatpush1.msra.mxu0 0.0
    %902 = vmatprep.subr.mxu0 0.0
    %903 = vmatpush1.msra.mxu0 0.0
    %904 = vmatprep.subr.mxu0 0.0
    %905 = vmatpush1.msra.mxu0 0.0
    %906 = vmatprep.subr.mxu0 0.0
    %907 = vmatpush1.msra.mxu0 0.0
    %908 = vmatprep.subr.mxu0 0.0
    %909 = vmatpush1.msra.mxu0 0.0
    %910 = vmatprep.subr.mxu0 0.0
    %911 = vmatpush1.msra.mxu0 0.0
    %912 = vmatprep.subr.mxu0 0.0
    %913 = vmatpush1.msra.mxu0 0.0
    %914 = vmatprep.subr.mxu0 0.0
    %915 = vmatpush1.msra.mxu0 0.0
    %916 = vmatprep.subr.mxu0 0.0
    %917 = vmatpush1.msra.mxu0 0.0
    %918 = vmatprep.subr.mxu0 0.0
    %919 = vmatpush1.msra.mxu0 0.0
    %920 = vmatprep.subr.mxu0 0.0
    %921 = vmatpush1.msra.mxu0 0.0
    %922 = vmatprep.subr.mxu0 0.0
    %923 = vmatpush1.msra.mxu0 0.0
    %924 = vmatprep.subr.mxu0 0.0
    %925 = vmatpush1.msra.mxu0 0.0
    %926 = vmatprep.subr.mxu0 0.0
    %927 = vmatpush1.msra.mxu0 0.0
    %928 = vmatprep.subr.mxu0 0.0
    %929 = vmatpush1.msra.mxu0 0.0
    %930 = vmatprep.subr.mxu0 0.0
    %931 = vmatpush1.msra.mxu0 0.0
    %932 = vmatprep.subr.mxu0 0.0
    %933 = vmatpush1.msra.mxu0 0.0
    %934 = vmatprep.subr.mxu0 0.0
    %935 = vmatpush1.msra.mxu0 0.0
    %936 = vmatprep.subr.mxu0 0.0
    %937 = vmatpush1.msra.mxu0 0.0
    %938 = vmatprep.subr.mxu0 0.0
    %939 = vmatpush1.msra.mxu0 0.0
    %940 = vmatprep.subr.mxu0 0.0
    %941 = vmatpush1.msra.mxu0 0.0
    %942 = vmatprep.subr.mxu0 0.0
    %943 = vmatpush1.msra.mxu0 0.0
    %944 = vmatprep.mubr.f32.mxu0 0.0
    %945 = vmatmul.mubr.f32.gmra.mrb[0].mxu0 %v125
    %v946 = vpop.f32.mrb[0].mxu0
    %v947 = vadd.f32 0.0, %v946
    %v948 = vpop.f32.mrb[0].mxu0
    %949 = vmatprep.mubr.f32.mxu0 0.0
    %950 = vmatmul.mubr.f32.gmra.mrb[0].mxu0 %v128
    %v951 = vpop.f32.mrb[0].mxu0
    %v952 = vadd.f32 0.0, %v951
    %v953 = vpop.f32.mrb[0].mxu0
    %954 = vdwg.mxu0
    %955 = vmatprep.subr.mxu0 0.0
    %956 = vmatpush1.msra.mxu0 %v120
    %957 = vmatprep.subr.mxu0 0.0
    %958 = vmatpush1.msra.mxu0 %v121
    %959 = vmatprep.subr.mxu0 0.0
    %960 = vmatpush1.msra.mxu0 %v122
    %961 = vmatprep.subr.mxu0 0.0
    %962 = vmatpush1.msra.mxu0 %v123
    %963 = vmatprep.subr.mxu0 0.0
    %964 = vmatpush1.msra.mxu0 0.0
    %965 = vmatprep.subr.mxu0 0.0
    %966 = vmatpush1.msra.mxu0 0.0
    %967 = vmatprep.subr.mxu0 0.0
    %968 = vmatpush1.msra.mxu0 0.0
    %969 = vmatprep.subr.mxu0 0.0
    %970 = vmatpush1.msra.mxu0 0.0
    %971 = vmatprep.subr.mxu0 0.0
    %972 = vmatpush1.msra.mxu0 0.0
    %973 = vmatprep.subr.mxu0 0.0
    %974 = vmatpush1.msra.mxu0 0.0
    %975 = vmatprep.subr.mxu0 0.0
    %976 = vmatpush1.msra.mxu0 0.0
    %977 = vmatprep.subr.mxu0 0.0
    %978 = vmatpush1.msra.mxu0 0.0
    %979 = vmatprep.subr.mxu0 0.0
    %980 = vmatpush1.msra.mxu0 0.0
    %981 = vmatprep.subr.mxu0 0.0
    %982 = vmatpush1.msra.mxu0 0.0
    %983 = vmatprep.subr.mxu0 0.0
    %984 = vmatpush1.msra.mxu0 0.0
    %985 = vmatprep.subr.mxu0 0.0
    %986 = vmatpush1.msra.mxu0 0.0
    %987 = vmatprep.subr.mxu0 0.0
    %988 = vmatpush1.msra.mxu0 0.0
    %989 = vmatprep.subr.mxu0 0.0
    %990 = vmatpush1.msra.mxu0 0.0
    %991 = vmatprep.subr.mxu0 0.0
    %992 = vmatpush1.msra.mxu0 0.0
    %993 = vmatprep.subr.mxu0 0.0
    %994 = vmatpush1.msra.mxu0 0.0
    %995 = vmatprep.subr.mxu0 0.0
    %996 = vmatpush1.msra.mxu0 0.0
    %997 = vmatprep.subr.mxu0 0.0
    %998 = vmatpush1.msra.mxu0 0.0
    %999 = vmatprep.subr.mxu0 0.0
    %1000 = vmatpush1.msra.mxu0 0.0
    %1001 = vmatprep.subr.mxu0 0.0
    %1002 = vmatpush1.msra.mxu0 0.0
    %1003 = vmatprep.subr.mxu0 0.0
    %1004 = vmatpush1.msra.mxu0 0.0
    %1005 = vmatprep.subr.mxu0 0.0
    %1006 = vmatpush1.msra.mxu0 0.0
    %1007 = vmatprep.subr.mxu0 0.0
    %1008 = vmatpush1.msra.mxu0 0.0
    %1009 = vmatprep.subr.mxu0 0.0
    %1010 = vmatpush1.msra.mxu0 0.0
    %1011 = vmatprep.subr.mxu0 0.0
    %1012 = vmatpush1.msra.mxu0 0.0
    %1013 = vmatprep.subr.mxu0 0.0
    %1014 = vmatpush1.msra.mxu0 0.0
    %1015 = vmatprep.subr.mxu0 0.0
    %1016 = vmatpush1.msra.mxu0 0.0
    %1017 = vmatprep.subr.mxu0 0.0
    %1018 = vmatpush1.msra.mxu0 0.0
    %1019 = vmatprep.mubr.f32.mxu0 0.0
    %1020 = vmatmul.mubr.f32.gmra.mrb[0].mxu0 %v125
    %v1021 = vpop.f32.mrb[0].mxu0
    %v1022 = vadd.f32 0.0, %v1021
    %v1023 = vpop.f32.mrb[0].mxu0
    %1024 = vmatprep.mubr.f32.mxu0 0.0
    %1025 = vmatmul.mubr.f32.gmra.mrb[0].mxu0 %v128
    %v1026 = vpop.f32.mrb[0].mxu0
    %v1027 = vadd.f32 0.0, %v1026
    %v1028 = vpop.f32.mrb[0].mxu0
    %1029 = vdwg.mxu0
    %vm1030 = vcmask 64512
    %v1032 = vsel %vm1030, %v197, 0
    %v1035 = vsel %vm1030, %v202, 0
    %v1038 = vsel %vm1030, %v497, 0
    %v1041 = vsel %vm1030, %v502, 0
    %1043 = vmatprep.subr.mxu0 0.0
    %1044 = vmatpush1.xpose.msra.mxu0 %v1038
    %1045 = vmatprep.subr.mxu0 0.0
    %1046 = vmatpush1.xpose.msra.mxu0 %v1041
    %1047 = vmatprep.subr.mxu0 0.0
    %1048 = vmatpush1.xpose.msra.mxu0 0.0
    %1049 = vmatprep.subr.mxu0 0.0
    %1050 = vmatpush1.xpose.msra.mxu0 0.0
    %1051 = vmatprep.subr.mxu0 0.0
    %1052 = vmatpush1.xpose.msra.mxu0 0.0
    %1053 = vmatprep.subr.mxu0 0.0
    %1054 = vmatpush1.xpose.msra.mxu0 0.0
    %1055 = vmatprep.subr.mxu0 0.0
    %1056 = vmatpush1.xpose.msra.mxu0 0.0
    %1057 = vmatprep.subr.mxu0 0.0
    %1058 = vmatpush1.xpose.msra.mxu0 0.0
    %1059 = vmatprep.subr.mxu0 0.0
    %1060 = vmatpush1.xpose.msra.mxu0 0.0
    %1061 = vmatprep.subr.mxu0 0.0
    %1062 = vmatpush1.xpose.msra.mxu0 0.0
    %1063 = vmatprep.subr.mxu0 0.0
    %1064 = vmatpush1.xpose.msra.mxu0 0.0
    %1065 = vmatprep.subr.mxu0 0.0
    %1066 = vmatpush1.xpose.msra.mxu0 0.0
    %1067 = vmatprep.subr.mxu0 0.0
    %1068 = vmatpush1.xpose.msra.mxu0 0.0
    %1069 = vmatprep.subr.mxu0 0.0
    %1070 = vmatpush1.xpose.msra.mxu0 0.0
    %1071 = vmatprep.subr.mxu0 0.0
    %1072 = vmatpush1.xpose.msra.mxu0 0.0
    %1073 = vmatprep.subr.mxu0 0.0
    %1074 = vmatpush1.xpose.msra.mxu0 0.0
    %1075 = vmatprep.subr.mxu0 0.0
    %1076 = vmatpush1.xpose.msra.mxu0 0.0
    %1077 = vmatprep.subr.mxu0 0.0
    %1078 = vmatpush1.xpose.msra.mxu0 0.0
    %1079 = vmatprep.subr.mxu0 0.0
    %1080 = vmatpush1.xpose.msra.mxu0 0.0
    %1081 = vmatprep.subr.mxu0 0.0
    %1082 = vmatpush1.xpose.msra.mxu0 0.0
    %1083 = vmatprep.subr.mxu0 0.0
    %1084 = vmatpush1.xpose.msra.mxu0 0.0
    %1085 = vmatprep.subr.mxu0 0.0
    %1086 = vmatpush1.xpose.msra.mxu0 0.0
    %1087 = vmatprep.subr.mxu0 0.0
    %1088 = vmatpush1.xpose.msra.mxu0 0.0
    %1089 = vmatprep.subr.mxu0 0.0
    %1090 = vmatpush1.xpose.msra.mxu0 0.0
    %1091 = vmatprep.subr.mxu0 0.0
    %1092 = vmatpush1.xpose.msra.mxu0 0.0
    %1093 = vmatprep.subr.mxu0 0.0
    %1094 = vmatpush1.xpose.msra.mxu0 0.0
    %1095 = vmatprep.subr.mxu0 0.0
    %1096 = vmatpush1.xpose.msra.mxu0 0.0
    %1097 = vmatprep.subr.mxu0 0.0
    %1098 = vmatpush1.xpose.msra.mxu0 0.0
    %1099 = vmatprep.subr.mxu0 0.0
    %1100 = vmatpush1.xpose.msra.mxu0 0.0
    %1101 = vmatprep.subr.mxu0 0.0
    %1102 = vmatpush1.xpose.msra.mxu0 0.0
    %1103 = vmatprep.subr.mxu0 0.0
    %1104 = vmatpush1.xpose.msra.mxu0 0.0
    %1105 = vmatprep.subr.mxu0 0.0
    %1106 = vmatpush1.xpose.msra.mxu0 0.0
    %1107 = vmatprep.mubr.f32.mxu0 0.0
    %1108 = vmatmul.mubr.f32.gmra.mrb[0].mxu0 %v1032
    %v1109 = vpop.f32.mrb[0].mxu0
    %v1110 = vadd.f32 0.0, %v1109
    %v1111 = vpop.f32.mrb[0].mxu0
    %1112 = vmatprep.mubr.f32.mxu0 0.0
    %1113 = vmatmul.mubr.f32.gmra.mrb[0].mxu0 %v1035
    %v1114 = vpop.f32.mrb[0].mxu0
    %v1115 = vadd.f32 0.0, %v1114
    %v1116 = vpop.f32.mrb[0].mxu0
    %1117 = vdwg.mxu0
    %v1119 = vsel %vm1030, %v272, 0
    %v1122 = vsel %vm1030, %v277, 0
    %v1125 = vsel %vm1030, %v572, 0
    %v1128 = vsel %vm1030, %v577, 0
    %1130 = vmatprep.subr.mxu0 0.0
    %1131 = vmatpush1.xpose.msra.mxu0 %v1125
    %1132 = vmatprep.subr.mxu0 0.0
    %1133 = vmatpush1.xpose.msra.mxu0 %v1128
    %1134 = vmatprep.subr.mxu0 0.0
    %1135 = vmatpush1.xpose.msra.mxu0 0.0
    %1136 = vmatprep.subr.mxu0 0.0
    %1137 = vmatpush1.xpose.msra.mxu0 0.0
    %1138 = vmatprep.subr.mxu0 0.0
    %1139 = vmatpush1.xpose.msra.mxu0 0.0
    %1140 = vmatprep.subr.mxu0 0.0
    %1141 = vmatpush1.xpose.msra.mxu0 0.0
    %1142 = vmatprep.subr.mxu0 0.0
    %1143 = vmatpush1.xpose.msra.mxu0 0.0
    %1144 = vmatprep.subr.mxu0 0.0
    %1145 = vmatpush1.xpose.msra.mxu0 0.0
    %1146 = vmatprep.subr.mxu0 0.0
    %1147 = vmatpush1.xpose.msra.mxu0 0.0
    %1148 = vmatprep.subr.mxu0 0.0
    %1149 = vmatpush1.xpose.msra.mxu0 0.0
    %1150 = vmatprep.subr.mxu0 0.0
    %1151 = vmatpush1.xpose.msra.mxu0 0.0
    %1152 = vmatprep.subr.mxu0 0.0
    %1153 = vmatpush1.xpose.msra.mxu0 0.0
    %1154 = vmatprep.subr.mxu0 0.0
    %1155 = vmatpush1.xpose.msra.mxu0 0.0
    %1156 = vmatprep.subr.mxu0 0.0
    %1157 = vmatpush1.xpose.msra.mxu0 0.0
    %1158 = vmatprep.subr.mxu0 0.0
    %1159 = vmatpush1.xpose.msra.mxu0 0.0
    %1160 = vmatprep.subr.mxu0 0.0
    %1161 = vmatpush1.xpose.msra.mxu0 0.0
    %1162 = vmatprep.subr.mxu0 0.0
    %1163 = vmatpush1.xpose.msra.mxu0 0.0
    %1164 = vmatprep.subr.mxu0 0.0
    %1165 = vmatpush1.xpose.msra.mxu0 0.0
    %1166 = vmatprep.subr.mxu0 0.0
    %1167 = vmatpush1.xpose.msra.mxu0 0.0
    %1168 = vmatprep.subr.mxu0 0.0
    %1169 = vmatpush1.xpose.msra.mxu0 0.0
    %1170 = vmatprep.subr.mxu0 0.0
    %1171 = vmatpush1.xpose.msra.mxu0 0.0
    %1172 = vmatprep.subr.mxu0 0.0
    %1173 = vmatpush1.xpose.msra.mxu0 0.0
    %1174 = vmatprep.subr.mxu0 0.0
    %1175 = vmatpush1.xpose.msra.mxu0 0.0
    %1176 = vmatprep.subr.mxu0 0.0
    %1177 = vmatpush1.xpose.msra.mxu0 0.0
    %1178 = vmatprep.subr.mxu0 0.0
    %1179 = vmatpush1.xpose.msra.mxu0 0.0
    %1180 = vmatprep.subr.mxu0 0.0
    %1181 = vmatpush1.xpose.msra.mxu0 0.0
    %1182 = vmatprep.subr.mxu0 0.0
    %1183 = vmatpush1.xpose.msra.mxu0 0.0
    %1184 = vmatprep.subr.mxu0 0.0
    %1185 = vmatpush1.xpose.msra.mxu0 0.0
    %1186 = vmatprep.subr.mxu0 0.0
    %1187 = vmatpush1.xpose.msra.mxu0 0.0
    %1188 = vmatprep.subr.mxu0 0.0
    %1189 = vmatpush1.xpose.msra.mxu0 0.0
    %1190 = vmatprep.subr.mxu0 0.0
    %1191 = vmatpush1.xpose.msra.mxu0 0.0
    %1192 = vmatprep.subr.mxu0 0.0
    %1193 = vmatpush1.xpose.msra.mxu0 0.0
    %1194 = vmatprep.mubr.f32.mxu0 0.0
    %1195 = vmatmul.mubr.f32.gmra.mrb[0].mxu0 %v1119
    %v1196 = vpop.f32.mrb[0].mxu0
    %v1197 = vadd.f32 0.0, %v1196
    %v1198 = vpop.f32.mrb[0].mxu0
    %1199 = vmatprep.mubr.f32.mxu0 0.0
    %1200 = vmatmul.mubr.f32.gmra.mrb[0].mxu0 %v1122
    %v1201 = vpop.f32.mrb[0].mxu0
    %v1202 = vadd.f32 0.0, %v1201
    %v1203 = vpop.f32.mrb[0].mxu0
    %1204 = vdwg.mxu0
    %v1206 = vsel %vm1030, %v347, 0
    %v1209 = vsel %vm1030, %v352, 0
    %v1212 = vsel %vm1030, %v647, 0
    %v1215 = vsel %vm1030, %v652, 0
    %1217 = vmatprep.subr.mxu0 0.0
    %1218 = vmatpush1.xpose.msra.mxu0 %v1212
    %1219 = vmatprep.subr.mxu0 0.0
    %1220 = vmatpush1.xpose.msra.mxu0 %v1215
    %1221 = vmatprep.subr.mxu0 0.0
    %1222 = vmatpush1.xpose.msra.mxu0 0.0
    %1223 = vmatprep.subr.mxu0 0.0
    %1224 = vmatpush1.xpose.msra.mxu0 0.0
    %1225 = vmatprep.subr.mxu0 0.0
    %1226 = vmatpush1.xpose.msra.mxu0 0.0
    %1227 = vmatprep.subr.mxu0 0.0
    %1228 = vmatpush1.xpose.msra.mxu0 0.0
    %1229 = vmatprep.subr.mxu0 0.0
    %1230 = vmatpush1.xpose.msra.mxu0 0.0
    %1231 = vmatprep.subr.mxu0 0.0
    %1232 = vmatpush1.xpose.msra.mxu0 0.0
    %1233 = vmatprep.subr.mxu0 0.0
    %1234 = vmatpush1.xpose.msra.mxu0 0.0
    %1235 = vmatprep.subr.mxu0 0.0
    %1236 = vmatpush1.xpose.msra.mxu0 0.0
    %1237 = vmatprep.subr.mxu0 0.0
    %1238 = vmatpush1.xpose.msra.mxu0 0.0
    %1239 = vmatprep.subr.mxu0 0.0
    %1240 = vmatpush1.xpose.msra.mxu0 0.0
    %1241 = vmatprep.subr.mxu0 0.0
    %1242 = vmatpush1.xpose.msra.mxu0 0.0
    %1243 = vmatprep.subr.mxu0 0.0
    %1244 = vmatpush1.xpose.msra.mxu0 0.0
    %1245 = vmatprep.subr.mxu0 0.0
    %1246 = vmatpush1.xpose.msra.mxu0 0.0
    %1247 = vmatprep.subr.mxu0 0.0
    %1248 = vmatpush1.xpose.msra.mxu0 0.0
    %1249 = vmatprep.subr.mxu0 0.0
    %1250 = vmatpush1.xpose.msra.mxu0 0.0
    %1251 = vmatprep.subr.mxu0 0.0
    %1252 = vmatpush1.xpose.msra.mxu0 0.0
    %1253 = vmatprep.subr.mxu0 0.0
    %1254 = vmatpush1.xpose.msra.mxu0 0.0
    %1255 = vmatprep.subr.mxu0 0.0
    %1256 = vmatpush1.xpose.msra.mxu0 0.0
    %1257 = vmatprep.subr.mxu0 0.0
    %1258 = vmatpush1.xpose.msra.mxu0 0.0
    %1259 = vmatprep.subr.mxu0 0.0
    %1260 = vmatpush1.xpose.msra.mxu0 0.0
    %1261 = vmatprep.subr.mxu0 0.0
    %1262 = vmatpush1.xpose.msra.mxu0 0.0
    %1263 = vmatprep.subr.mxu0 0.0
    %1264 = vmatpush1.xpose.msra.mxu0 0.0
    %1265 = vmatprep.subr.mxu0 0.0
    %1266 = vmatpush1.xpose.msra.mxu0 0.0
    %1267 = vmatprep.subr.mxu0 0.0
    %1268 = vmatpush1.xpose.msra.mxu0 0.0
    %1269 = vmatprep.subr.mxu0 0.0
    %1270 = vmatpush1.xpose.msra.mxu0 0.0
    %1271 = vmatprep.subr.mxu0 0.0
    %1272 = vmatpush1.xpose.msra.mxu0 0.0
    %1273 = vmatprep.subr.mxu0 0.0
    %1274 = vmatpush1.xpose.msra.mxu0 0.0
    %1275 = vmatprep.subr.mxu0 0.0
    %1276 = vmatpush1.xpose.msra.mxu0 0.0
    %1277 = vmatprep.subr.mxu0 0.0
    %1278 = vmatpush1.xpose.msra.mxu0 0.0
    %1279 = vmatprep.subr.mxu0 0.0
    %1280 = vmatpush1.xpose.msra.mxu0 0.0
    %1281 = vmatprep.mubr.f32.mxu0 0.0
    %1282 = vmatmul.mubr.f32.gmra.mrb[0].mxu0 %v1206
    %v1283 = vpop.f32.mrb[0].mxu0
    %v1284 = vadd.f32 0.0, %v1283
    %v1285 = vpop.f32.mrb[0].mxu0
    %1286 = vmatprep.mubr.f32.mxu0 0.0
    %1287 = vmatmul.mubr.f32.gmra.mrb[0].mxu0 %v1209
    %v1288 = vpop.f32.mrb[0].mxu0
    %v1289 = vadd.f32 0.0, %v1288
    %v1290 = vpop.f32.mrb[0].mxu0
    %1291 = vdwg.mxu0
    %v1293 = vsel %vm1030, %v422, 0
    %v1296 = vsel %vm1030, %v427, 0
    %v1299 = vsel %vm1030, %v722, 0
    %v1302 = vsel %vm1030, %v727, 0
    %1304 = vmatprep.subr.mxu0 0.0
    %1305 = vmatpush1.xpose.msra.mxu0 %v1299
    %1306 = vmatprep.subr.mxu0 0.0
    %1307 = vmatpush1.xpose.msra.mxu0 %v1302
    %1308 = vmatprep.subr.mxu0 0.0
    %1309 = vmatpush1.xpose.msra.mxu0 0.0
    %1310 = vmatprep.subr.mxu0 0.0
    %1311 = vmatpush1.xpose.msra.mxu0 0.0
    %1312 = vmatprep.subr.mxu0 0.0
    %1313 = vmatpush1.xpose.msra.mxu0 0.0
    %1314 = vmatprep.subr.mxu0 0.0
    %1315 = vmatpush1.xpose.msra.mxu0 0.0
    %1316 = vmatprep.subr.mxu0 0.0
    %1317 = vmatpush1.xpose.msra.mxu0 0.0
    %1318 = vmatprep.subr.mxu0 0.0
    %1319 = vmatpush1.xpose.msra.mxu0 0.0
    %1320 = vmatprep.subr.mxu0 0.0
    %1321 = vmatpush1.xpose.msra.mxu0 0.0
    %1322 = vmatprep.subr.mxu0 0.0
    %1323 = vmatpush1.xpose.msra.mxu0 0.0
    %1324 = vmatprep.subr.mxu0 0.0
    %1325 = vmatpush1.xpose.msra.mxu0 0.0
    %1326 = vmatprep.subr.mxu0 0.0
    %1327 = vmatpush1.xpose.msra.mxu0 0.0
    %1328 = vmatprep.subr.mxu0 0.0
    %1329 = vmatpush1.xpose.msra.mxu0 0.0
    %1330 = vmatprep.subr.mxu0 0.0
    %1331 = vmatpush1.xpose.msra.mxu0 0.0
    %1332 = vmatprep.subr.mxu0 0.0
    %1333 = vmatpush1.xpose.msra.mxu0 0.0
    %1334 = vmatprep.subr.mxu0 0.0
    %1335 = vmatpush1.xpose.msra.mxu0 0.0
    %1336 = vmatprep.subr.mxu0 0.0
    %1337 = vmatpush1.xpose.msra.mxu0 0.0
    %1338 = vmatprep.subr.mxu0 0.0
    %1339 = vmatpush1.xpose.msra.mxu0 0.0
    %1340 = vmatprep.subr.mxu0 0.0
    %1341 = vmatpush1.xpose.msra.mxu0 0.0
    %1342 = vmatprep.subr.mxu0 0.0
    %1343 = vmatpush1.xpose.msra.mxu0 0.0
    %1344 = vmatprep.subr.mxu0 0.0
    %1345 = vmatpush1.xpose.msra.mxu0 0.0
    %1346 = vmatprep.subr.mxu0 0.0
    %1347 = vmatpush1.xpose.msra.mxu0 0.0
    %1348 = vmatprep.subr.mxu0 0.0
    %1349 = vmatpush1.xpose.msra.mxu0 0.0
    %1350 = vmatprep.subr.mxu0 0.0
    %1351 = vmatpush1.xpose.msra.mxu0 0.0
    %1352 = vmatprep.subr.mxu0 0.0
    %1353 = vmatpush1.xpose.msra.mxu0 0.0
    %1354 = vmatprep.subr.mxu0 0.0
    %1355 = vmatpush1.xpose.msra.mxu0 0.0
    %1356 = vmatprep.subr.mxu0 0.0
    %1357 = vmatpush1.xpose.msra.mxu0 0.0
    %1358 = vmatprep.subr.mxu0 0.0
    %1359 = vmatpush1.xpose.msra.mxu0 0.0
    %1360 = vmatprep.subr.mxu0 0.0
    %1361 = vmatpush1.xpose.msra.mxu0 0.0
    %1362 = vmatprep.subr.mxu0 0.0
    %1363 = vmatpush1.xpose.msra.mxu0 0.0
    %1364 = vmatprep.subr.mxu0 0.0
    %1365 = vmatpush1.xpose.msra.mxu0 0.0
    %1366 = vmatprep.subr.mxu0 0.0
    %1367 = vmatpush1.xpose.msra.mxu0 0.0
    %1368 = vmatprep.mubr.f32.mxu0 0.0
    %1369 = vmatmul.mubr.f32.gmra.mrb[0].mxu0 %v1293
    %v1370 = vpop.f32.mrb[0].mxu0
    %v1371 = vadd.f32 0.0, %v1370
    %v1372 = vpop.f32.mrb[0].mxu0
    %1373 = vmatprep.mubr.f32.mxu0 0.0
    %1374 = vmatmul.mubr.f32.gmra.mrb[0].mxu0 %v1296
    %v1375 = vpop.f32.mrb[0].mxu0
    %v1376 = vadd.f32 0.0, %v1375
    %v1377 = vpop.f32.mrb[0].mxu0
    %1378 = vdwg.mxu0
    %v1379 = vmul.f32 %v1110, 0.35355338
    %v1380 = vmul.f32 %v1115, 0.35355338
    %v1381 = vmul.f32 %v1197, 0.35355338
    %v1382 = vmul.f32 %v1202, 0.35355338
    %v1383 = vmul.f32 %v1284, 0.35355338
    %v1384 = vmul.f32 %v1289, 0.35355338
    %v1385 = vmul.f32 %v1371, 0.35355338
    %v1386 = vmul.f32 %v1376, 0.35355338
    %v1387 = vadd.f32 %v1379, %v32
    %v1388 = vadd.f32 %v1380, %v33
    %v1389 = vadd.f32 %v1381, %v32
    %v1390 = vadd.f32 %v1382, %v33
    %v1391 = vadd.f32 %v1383, %v32
    %v1392 = vadd.f32 %v1384, %v33
    %v1393 = vadd.f32 %v1385, %v32
    %v1394 = vadd.f32 %v1386, %v33
    %vm1395 = vcmask 130048
    %v1396 = vsel %vm1395, %v1387, -inf
    %1397 = vmax.xlane.f32.xlu0 %v1396
    %v1398 = vpop.xlane.xlu0 %1397
    %v1399 = vsel %vm1395, %v1388, -inf
    %1400 = vmax.xlane.f32.xlu0 %v1399
    %v1401 = vpop.xlane.xlu0 %1400
    %v1402 = vsel %vm1395, %v1389, -inf
    %1403 = vmax.xlane.f32.xlu0 %v1402
    %v1404 = vpop.xlane.xlu0 %1403
    %v1405 = vsel %vm1395, %v1390, -inf
    %1406 = vmax.xlane.f32.xlu0 %v1405
    %v1407 = vpop.xlane.xlu0 %1406
    %v1408 = vsel %vm1395, %v1391, -inf
    %1409 = vmax.xlane.f32.xlu0 %v1408
    %v1410 = vpop.xlane.xlu0 %1409
    %v1411 = vsel %vm1395, %v1392, -inf
    %1412 = vmax.xlane.f32.xlu0 %v1411
    %v1413 = vpop.xlane.xlu0 %1412
    %v1414 = vsel %vm1395, %v1393, -inf
    %1415 = vmax.xlane.f32.xlu0 %v1414
    %v1416 = vpop.xlane.xlu0 %1415
    %v1417 = vsel %vm1395, %v1394, -inf
    %1418 = vmax.xlane.f32.xlu0 %v1417
    %v1419 = vpop.xlane.xlu0 %1418
    %v1420 = vsub.f32 %v1387, %v1398
    %v1421 = vsub.f32 %v1388, %v1401
    %v1422 = vsub.f32 %v1389, %v1404
    %v1423 = vsub.f32 %v1390, %v1407
    %v1424 = vsub.f32 %v1391, %v1410
    %v1425 = vsub.f32 %v1392, %v1413
    %v1426 = vsub.f32 %v1393, %v1416
    %v1427 = vsub.f32 %v1394, %v1419
    %v1428 = vmul.f32 %v1420, 1.442695
    %v1429 = vpow.pop %v1428
    %v1430 = vmul.f32 %v1421, 1.442695
    %v1431 = vpow.pop %v1430
    %v1432 = vmul.f32 %v1422, 1.442695
    %v1433 = vpow.pop %v1432
    %v1434 = vmul.f32 %v1423, 1.442695
    %v1435 = vpow.pop %v1434
    %v1436 = vmul.f32 %v1424, 1.442695
    %v1437 = vpow.pop %v1436
    %v1438 = vmul.f32 %v1425, 1.442695
    %v1439 = vpow.pop %v1438
    %v1440 = vmul.f32 %v1426, 1.442695
    %v1441 = vpow.pop %v1440
    %v1442 = vmul.f32 %v1427, 1.442695
    %v1443 = vpow.pop %v1442
    %v1444 = vsel %vm1395, %v1429, 0.0
    %1445 = vadd.xlane.f32.xlu0 %v1444
    %v1446 = vpop.xlane.xlu0 %1445
    %v1447 = vsel %vm1395, %v1431, 0.0
    %1448 = vadd.xlane.f32.xlu0 %v1447
    %v1449 = vpop.xlane.xlu0 %1448
    %v1450 = vsel %vm1395, %v1433, 0.0
    %1451 = vadd.xlane.f32.xlu0 %v1450
    %v1452 = vpop.xlane.xlu0 %1451
    %v1453 = vsel %vm1395, %v1435, 0.0
    %1454 = vadd.xlane.f32.xlu0 %v1453
    %v1455 = vpop.xlane.xlu0 %1454
    %v1456 = vsel %vm1395, %v1437, 0.0
    %1457 = vadd.xlane.f32.xlu0 %v1456
    %v1458 = vpop.xlane.xlu0 %1457
    %v1459 = vsel %vm1395, %v1439, 0.0
    %1460 = vadd.xlane.f32.xlu0 %v1459
    %v1461 = vpop.xlane.xlu0 %1460
    %v1462 = vsel %vm1395, %v1441, 0.0
    %1463 = vadd.xlane.f32.xlu0 %v1462
    %v1464 = vpop.xlane.xlu0 %1463
    %v1465 = vsel %vm1395, %v1443, 0.0
    %1466 = vadd.xlane.f32.xlu0 %v1465
    %v1467 = vpop.xlane.xlu0 %1466
    %v1468 = vrcp.pop %v1446
    %v1469 = vrcp.pop %v1449
    %v1470 = vrcp.pop %v1452
    %v1471 = vrcp.pop %v1455
    %v1472 = vrcp.pop %v1458
    %v1473 = vrcp.pop %v1461
    %v1474 = vrcp.pop %v1464
    %v1475 = vrcp.pop %v1467
    %v1476 = vmul.f32 %v1429, %v1468
    %v1477 = vmul.f32 %v1431, %v1469
    %v1478 = vmul.f32 %v1433, %v1470
    %v1479 = vmul.f32 %v1435, %v1471
    %v1480 = vmul.f32 %v1437, %v1472
    %v1481 = vmul.f32 %v1439, %v1473
    %v1482 = vmul.f32 %v1441, %v1474
    %v1483 = vmul.f32 %v1443, %v1475
    %v1485 = vsel %vm1395, %v1476, 0
    %v1488 = vsel %vm1395, %v1477, 0
    %1490 = vmatprep.subr.mxu0 0.0
    %1491 = vmatpush1.msra.mxu0 %v797
    %1492 = vmatprep.subr.mxu0 0.0
    %1493 = vmatpush1.msra.mxu0 %v802
    %1494 = vmatprep.subr.mxu0 0.0
    %1495 = vmatpush1.msra.mxu0 0.0
    %1496 = vmatprep.subr.mxu0 0.0
    %1497 = vmatpush1.msra.mxu0 0.0
    %1498 = vmatprep.subr.mxu0 0.0
    %1499 = vmatpush1.msra.mxu0 0.0
    %1500 = vmatprep.subr.mxu0 0.0
    %1501 = vmatpush1.msra.mxu0 0.0
    %1502 = vmatprep.subr.mxu0 0.0
    %1503 = vmatpush1.msra.mxu0 0.0
    %1504 = vmatprep.subr.mxu0 0.0
    %1505 = vmatpush1.msra.mxu0 0.0
    %1506 = vmatprep.subr.mxu0 0.0
    %1507 = vmatpush1.msra.mxu0 0.0
    %1508 = vmatprep.subr.mxu0 0.0
    %1509 = vmatpush1.msra.mxu0 0.0
    %1510 = vmatprep.subr.mxu0 0.0
    %1511 = vmatpush1.msra.mxu0 0.0
    %1512 = vmatprep.subr.mxu0 0.0
    %1513 = vmatpush1.msra.mxu0 0.0
    %1514 = vmatprep.subr.mxu0 0.0
    %1515 = vmatpush1.msra.mxu0 0.0
    %1516 = vmatprep.subr.mxu0 0.0
    %1517 = vmatpush1.msra.mxu0 0.0
    %1518 = vmatprep.subr.mxu0 0.0
    %1519 = vmatpush1.msra.mxu0 0.0
    %1520 = vmatprep.subr.mxu0 0.0
    %1521 = vmatpush1.msra.mxu0 0.0
    %1522 = vmatprep.subr.mxu0 0.0
    %1523 = vmatpush1.msra.mxu0 0.0
    %1524 = vmatprep.subr.mxu0 0.0
    %1525 = vmatpush1.msra.mxu0 0.0
    %1526 = vmatprep.subr.mxu0 0.0
    %1527 = vmatpush1.msra.mxu0 0.0
    %1528 = vmatprep.subr.mxu0 0.0
    %1529 = vmatpush1.msra.mxu0 0.0
    %1530 = vmatprep.subr.mxu0 0.0
    %1531 = vmatpush1.msra.mxu0 0.0
    %1532 = vmatprep.subr.mxu0 0.0
    %1533 = vmatpush1.msra.mxu0 0.0
    %1534 = vmatprep.subr.mxu0 0.0
    %1535 = vmatpush1.msra.mxu0 0.0
    %1536 = vmatprep.subr.mxu0 0.0
    %1537 = vmatpush1.msra.mxu0 0.0
    %1538 = vmatprep.subr.mxu0 0.0
    %1539 = vmatpush1.msra.mxu0 0.0
    %1540 = vmatprep.subr.mxu0 0.0
    %1541 = vmatpush1.msra.mxu0 0.0
    %1542 = vmatprep.subr.mxu0 0.0
    %1543 = vmatpush1.msra.mxu0 0.0
    %1544 = vmatprep.subr.mxu0 0.0
    %1545 = vmatpush1.msra.mxu0 0.0
    %1546 = vmatprep.subr.mxu0 0.0
    %1547 = vmatpush1.msra.mxu0 0.0
    %1548 = vmatprep.subr.mxu0 0.0
    %1549 = vmatpush1.msra.mxu0 0.0
    %1550 = vmatprep.subr.mxu0 0.0
    %1551 = vmatpush1.msra.mxu0 0.0
    %1552 = vmatprep.subr.mxu0 0.0
    %1553 = vmatpush1.msra.mxu0 0.0
    %1554 = vmatprep.mubr.f32.mxu0 0.0
    %1555 = vmatmul.mubr.f32.gmra.mrb[0].mxu0 %v1485
    %v1556 = vpop.f32.mrb[0].mxu0
    %v1557 = vadd.f32 0.0, %v1556
    %v1558 = vpop.f32.mrb[0].mxu0
    %1559 = vmatprep.mubr.f32.mxu0 0.0
    %1560 = vmatmul.mubr.f32.gmra.mrb[0].mxu0 %v1488
    %v1561 = vpop.f32.mrb[0].mxu0
    %v1562 = vadd.f32 0.0, %v1561
    %v1563 = vpop.f32.mrb[0].mxu0
    %1564 = vdwg.mxu0
    %v1566 = vsel %vm1395, %v1478, 0
    %v1569 = vsel %vm1395, %v1479, 0
    %1571 = vmatprep.subr.mxu0 0.0
    %1572 = vmatpush1.msra.mxu0 %v872
    %1573 = vmatprep.subr.mxu0 0.0
    %1574 = vmatpush1.msra.mxu0 %v877
    %1575 = vmatprep.subr.mxu0 0.0
    %1576 = vmatpush1.msra.mxu0 0.0
    %1577 = vmatprep.subr.mxu0 0.0
    %1578 = vmatpush1.msra.mxu0 0.0
    %1579 = vmatprep.subr.mxu0 0.0
    %1580 = vmatpush1.msra.mxu0 0.0
    %1581 = vmatprep.subr.mxu0 0.0
    %1582 = vmatpush1.msra.mxu0 0.0
    %1583 = vmatprep.subr.mxu0 0.0
    %1584 = vmatpush1.msra.mxu0 0.0
    %1585 = vmatprep.subr.mxu0 0.0
    %1586 = vmatpush1.msra.mxu0 0.0
    %1587 = vmatprep.subr.mxu0 0.0
    %1588 = vmatpush1.msra.mxu0 0.0
    %1589 = vmatprep.subr.mxu0 0.0
    %1590 = vmatpush1.msra.mxu0 0.0
    %1591 = vmatprep.subr.mxu0 0.0
    %1592 = vmatpush1.msra.mxu0 0.0
    %1593 = vmatprep.subr.mxu0 0.0
    %1594 = vmatpush1.msra.mxu0 0.0
    %1595 = vmatprep.subr.mxu0 0.0
    %1596 = vmatpush1.msra.mxu0 0.0
    %1597 = vmatprep.subr.mxu0 0.0
    %1598 = vmatpush1.msra.mxu0 0.0
    %1599 = vmatprep.subr.mxu0 0.0
    %1600 = vmatpush1.msra.mxu0 0.0
    %1601 = vmatprep.subr.mxu0 0.0
    %1602 = vmatpush1.msra.mxu0 0.0
    %1603 = vmatprep.subr.mxu0 0.0
    %1604 = vmatpush1.msra.mxu0 0.0
    %1605 = vmatprep.subr.mxu0 0.0
    %1606 = vmatpush1.msra.mxu0 0.0
    %1607 = vmatprep.subr.mxu0 0.0
    %1608 = vmatpush1.msra.mxu0 0.0
    %1609 = vmatprep.subr.mxu0 0.0
    %1610 = vmatpush1.msra.mxu0 0.0
    %1611 = vmatprep.subr.mxu0 0.0
    %1612 = vmatpush1.msra.mxu0 0.0
    %1613 = vmatprep.subr.mxu0 0.0
    %1614 = vmatpush1.msra.mxu0 0.0
    %1615 = vmatprep.subr.mxu0 0.0
    %1616 = vmatpush1.msra.mxu0 0.0
    %1617 = vmatprep.subr.mxu0 0.0
    %1618 = vmatpush1.msra.mxu0 0.0
    %1619 = vmatprep.subr.mxu0 0.0
    %1620 = vmatpush1.msra.mxu0 0.0
    %1621 = vmatprep.subr.mxu0 0.0
    %1622 = vmatpush1.msra.mxu0 0.0
    %1623 = vmatprep.subr.mxu0 0.0
    %1624 = vmatpush1.msra.mxu0 0.0
    %1625 = vmatprep.subr.mxu0 0.0
    %1626 = vmatpush1.msra.mxu0 0.0
    %1627 = vmatprep.subr.mxu0 0.0
    %1628 = vmatpush1.msra.mxu0 0.0
    %1629 = vmatprep.subr.mxu0 0.0
    %1630 = vmatpush1.msra.mxu0 0.0
    %1631 = vmatprep.subr.mxu0 0.0
    %1632 = vmatpush1.msra.mxu0 0.0
    %1633 = vmatprep.subr.mxu0 0.0
    %1634 = vmatpush1.msra.mxu0 0.0
    %1635 = vmatprep.mubr.f32.mxu0 0.0
    %1636 = vmatmul.mubr.f32.gmra.mrb[0].mxu0 %v1566
    %v1637 = vpop.f32.mrb[0].mxu0
    %v1638 = vadd.f32 0.0, %v1637
    %v1639 = vpop.f32.mrb[0].mxu0
    %1640 = vmatprep.mubr.f32.mxu0 0.0
    %1641 = vmatmul.mubr.f32.gmra.mrb[0].mxu0 %v1569
    %v1642 = vpop.f32.mrb[0].mxu0
    %v1643 = vadd.f32 0.0, %v1642
    %v1644 = vpop.f32.mrb[0].mxu0
    %1645 = vdwg.mxu0
    %v1647 = vsel %vm1395, %v1480, 0
    %v1650 = vsel %vm1395, %v1481, 0
    %1652 = vmatprep.subr.mxu0 0.0
    %1653 = vmatpush1.msra.mxu0 %v947
    %1654 = vmatprep.subr.mxu0 0.0
    %1655 = vmatpush1.msra.mxu0 %v952
    %1656 = vmatprep.subr.mxu0 0.0
    %1657 = vmatpush1.msra.mxu0 0.0
    %1658 = vmatprep.subr.mxu0 0.0
    %1659 = vmatpush1.msra.mxu0 0.0
    %1660 = vmatprep.subr.mxu0 0.0
    %1661 = vmatpush1.msra.mxu0 0.0
    %1662 = vmatprep.subr.mxu0 0.0
    %1663 = vmatpush1.msra.mxu0 0.0
    %1664 = vmatprep.subr.mxu0 0.0
    %1665 = vmatpush1.msra.mxu0 0.0
    %1666 = vmatprep.subr.mxu0 0.0
    %1667 = vmatpush1.msra.mxu0 0.0
    %1668 = vmatprep.subr.mxu0 0.0
    %1669 = vmatpush1.msra.mxu0 0.0
    %1670 = vmatprep.subr.mxu0 0.0
    %1671 = vmatpush1.msra.mxu0 0.0
    %1672 = vmatprep.subr.mxu0 0.0
    %1673 = vmatpush1.msra.mxu0 0.0
    %1674 = vmatprep.subr.mxu0 0.0
    %1675 = vmatpush1.msra.mxu0 0.0
    %1676 = vmatprep.subr.mxu0 0.0
    %1677 = vmatpush1.msra.mxu0 0.0
    %1678 = vmatprep.subr.mxu0 0.0
    %1679 = vmatpush1.msra.mxu0 0.0
    %1680 = vmatprep.subr.mxu0 0.0
    %1681 = vmatpush1.msra.mxu0 0.0
    %1682 = vmatprep.subr.mxu0 0.0
    %1683 = vmatpush1.msra.mxu0 0.0
    %1684 = vmatprep.subr.mxu0 0.0
    %1685 = vmatpush1.msra.mxu0 0.0
    %1686 = vmatprep.subr.mxu0 0.0
    %1687 = vmatpush1.msra.mxu0 0.0
    %1688 = vmatprep.subr.mxu0 0.0
    %1689 = vmatpush1.msra.mxu0 0.0
    %1690 = vmatprep.subr.mxu0 0.0
    %1691 = vmatpush1.msra.mxu0 0.0
    %1692 = vmatprep.subr.mxu0 0.0
    %1693 = vmatpush1.msra.mxu0 0.0
    %1694 = vmatprep.subr.mxu0 0.0
    %1695 = vmatpush1.msra.mxu0 0.0
    %1696 = vmatprep.subr.mxu0 0.0
    %1697 = vmatpush1.msra.mxu0 0.0
    %1698 = vmatprep.subr.mxu0 0.0
    %1699 = vmatpush1.msra.mxu0 0.0
    %1700 = vmatprep.subr.mxu0 0.0
    %1701 = vmatpush1.msra.mxu0 0.0
    %1702 = vmatprep.subr.mxu0 0.0
    %1703 = vmatpush1.msra.mxu0 0.0
    %1704 = vmatprep.subr.mxu0 0.0
    %1705 = vmatpush1.msra.mxu0 0.0
    %1706 = vmatprep.subr.mxu0 0.0
    %1707 = vmatpush1.msra.mxu0 0.0
    %1708 = vmatprep.subr.mxu0 0.0
    %1709 = vmatpush1.msra.mxu0 0.0
    %1710 = vmatprep.subr.mxu0 0.0
    %1711 = vmatpush1.msra.mxu0 0.0
    %1712 = vmatprep.subr.mxu0 0.0
    %1713 = vmatpush1.msra.mxu0 0.0
    %1714 = vmatprep.subr.mxu0 0.0
    %1715 = vmatpush1.msra.mxu0 0.0
    %1716 = vmatprep.mubr.f32.mxu0 0.0
    %1717 = vmatmul.mubr.f32.gmra.mrb[0].mxu0 %v1647
    %v1718 = vpop.f32.mrb[0].mxu0
    %v1719 = vadd.f32 0.0, %v1718
    %v1720 = vpop.f32.mrb[0].mxu0
    %1721 = vmatprep.mubr.f32.mxu0 0.0
    %1722 = vmatmul.mubr.f32.gmra.mrb[0].mxu0 %v1650
    %v1723 = vpop.f32.mrb[0].mxu0
    %v1724 = vadd.f32 0.0, %v1723
    %v1725 = vpop.f32.mrb[0].mxu0
    %1726 = vdwg.mxu0
    %v1728 = vsel %vm1395, %v1482, 0
    %v1731 = vsel %vm1395, %v1483, 0
    %1733 = vmatprep.subr.mxu0 0.0
    %1734 = vmatpush1.msra.mxu0 %v1022
    %1735 = vmatprep.subr.mxu0 0.0
    %1736 = vmatpush1.msra.mxu0 %v1027
    %1737 = vmatprep.subr.mxu0 0.0
    %1738 = vmatpush1.msra.mxu0 0.0
    %1739 = vmatprep.subr.mxu0 0.0
    %1740 = vmatpush1.msra.mxu0 0.0
    %1741 = vmatprep.subr.mxu0 0.0
    %1742 = vmatpush1.msra.mxu0 0.0
    %1743 = vmatprep.subr.mxu0 0.0
    %1744 = vmatpush1.msra.mxu0 0.0
    %1745 = vmatprep.subr.mxu0 0.0
    %1746 = vmatpush1.msra.mxu0 0.0
    %1747 = vmatprep.subr.mxu0 0.0
    %1748 = vmatpush1.msra.mxu0 0.0
    %1749 = vmatprep.subr.mxu0 0.0
    %1750 = vmatpush1.msra.mxu0 0.0
    %1751 = vmatprep.subr.mxu0 0.0
    %1752 = vmatpush1.msra.mxu0 0.0
    %1753 = vmatprep.subr.mxu0 0.0
    %1754 = vmatpush1.msra.mxu0 0.0
    %1755 = vmatprep.subr.mxu0 0.0
    %1756 = vmatpush1.msra.mxu0 0.0
    %1757 = vmatprep.subr.mxu0 0.0
    %1758 = vmatpush1.msra.mxu0 0.0
    %1759 = vmatprep.subr.mxu0 0.0
    %1760 = vmatpush1.msra.mxu0 0.0
    %1761 = vmatprep.subr.mxu0 0.0
    %1762 = vmatpush1.msra.mxu0 0.0
    %1763 = vmatprep.subr.mxu0 0.0
    %1764 = vmatpush1.msra.mxu0 0.0
    %1765 = vmatprep.subr.mxu0 0.0
    %1766 = vmatpush1.msra.mxu0 0.0
    %1767 = vmatprep.subr.mxu0 0.0
    %1768 = vmatpush1.msra.mxu0 0.0
    %1769 = vmatprep.subr.mxu0 0.0
    %1770 = vmatpush1.msra.mxu0 0.0
    %1771 = vmatprep.subr.mxu0 0.0
    %1772 = vmatpush1.msra.mxu0 0.0
    %1773 = vmatprep.subr.mxu0 0.0
    %1774 = vmatpush1.msra.mxu0 0.0
    %1775 = vmatprep.subr.mxu0 0.0
    %1776 = vmatpush1.msra.mxu0 0.0
    %1777 = vmatprep.subr.mxu0 0.0
    %1778 = vmatpush1.msra.mxu0 0.0
    %1779 = vmatprep.subr.mxu0 0.0
    %1780 = vmatpush1.msra.mxu0 0.0
    %1781 = vmatprep.subr.mxu0 0.0
    %1782 = vmatpush1.msra.mxu0 0.0
    %1783 = vmatprep.subr.mxu0 0.0
    %1784 = vmatpush1.msra.mxu0 0.0
    %1785 = vmatprep.subr.mxu0 0.0
    %1786 = vmatpush1.msra.mxu0 0.0
    %1787 = vmatprep.subr.mxu0 0.0
    %1788 = vmatpush1.msra.mxu0 0.0
    %1789 = vmatprep.subr.mxu0 0.0
    %1790 = vmatpush1.msra.mxu0 0.0
    %1791 = vmatprep.subr.mxu0 0.0
    %1792 = vmatpush1.msra.mxu0 0.0
    %1793 = vmatprep.subr.mxu0 0.0
    %1794 = vmatpush1.msra.mxu0 0.0
    %1795 = vmatprep.subr.mxu0 0.0
    %1796 = vmatpush1.msra.mxu0 0.0
    %1797 = vmatprep.mubr.f32.mxu0 0.0
    %1798 = vmatmul.mubr.f32.gmra.mrb[0].mxu0 %v1728
    %v1799 = vpop.f32.mrb[0].mxu0
    %v1800 = vadd.f32 0.0, %v1799
    %v1801 = vpop.f32.mrb[0].mxu0
    %1802 = vmatprep.mubr.f32.mxu0 0.0
    %1803 = vmatmul.mubr.f32.gmra.mrb[0].mxu0 %v1731
    %v1804 = vpop.f32.mrb[0].mxu0
    %v1805 = vadd.f32 0.0, %v1804
    %v1806 = vpop.f32.mrb[0].mxu0
    %1807 = vdwg.mxu0
    %v1808 = vld [vmem:[%s3] sm:$0xff]
    %s1809 = scalar_lea.vmem %s3, 8
    %v1810 = vld [vmem:[%s1809] sm:$0xff]
    %v1812 = vsel %vm1030, %v1638, 0
    %v1815 = vsel %vm1030, %v1643, 0
    %1817 = vmatprep.subr.mxu0 0.0
    %1818 = vmatpush1.msra.mxu0 %v1810
    %1819 = vmatprep.subr.mxu0 0.0
    %1820 = vmatpush1.msra.mxu0 0.0
    %1821 = vmatprep.subr.mxu0 0.0
    %1822 = vmatpush1.msra.mxu0 0.0
    %1823 = vmatprep.subr.mxu0 0.0
    %1824 = vmatpush1.msra.mxu0 0.0
    %1825 = vmatprep.subr.mxu0 0.0
    %1826 = vmatpush1.msra.mxu0 0.0
    %1827 = vmatprep.subr.mxu0 0.0
    %1828 = vmatpush1.msra.mxu0 0.0
    %1829 = vmatprep.subr.mxu0 0.0
    %1830 = vmatpush1.msra.mxu0 0.0
    %1831 = vmatprep.subr.mxu0 0.0
    %1832 = vmatpush1.msra.mxu0 0.0
    %1833 = vmatprep.subr.mxu0 0.0
    %1834 = vmatpush1.msra.mxu0 0.0
    %1835 = vmatprep.subr.mxu0 0.0
    %1836 = vmatpush1.msra.mxu0 0.0
    %1837 = vmatprep.subr.mxu0 0.0
    %1838 = vmatpush1.msra.mxu0 0.0
    %1839 = vmatprep.subr.mxu0 0.0
    %1840 = vmatpush1.msra.mxu0 0.0
    %1841 = vmatprep.subr.mxu0 0.0
    %1842 = vmatpush1.msra.mxu0 0.0
    %1843 = vmatprep.subr.mxu0 0.0
    %1844 = vmatpush1.msra.mxu0 0.0
    %1845 = vmatprep.subr.mxu0 0.0
    %1846 = vmatpush1.msra.mxu0 0.0
    %1847 = vmatprep.subr.mxu0 0.0
    %1848 = vmatpush1.msra.mxu0 0.0
    %1849 = vmatprep.subr.mxu0 0.0
    %1850 = vmatpush1.msra.mxu0 0.0
    %1851 = vmatprep.subr.mxu0 0.0
    %1852 = vmatpush1.msra.mxu0 0.0
    %1853 = vmatprep.subr.mxu0 0.0
    %1854 = vmatpush1.msra.mxu0 0.0
    %1855 = vmatprep.subr.mxu0 0.0
    %1856 = vmatpush1.msra.mxu0 0.0
    %1857 = vmatprep.subr.mxu0 0.0
    %1858 = vmatpush1.msra.mxu0 0.0
    %1859 = vmatprep.subr.mxu0 0.0
    %1860 = vmatpush1.msra.mxu0 0.0
    %1861 = vmatprep.subr.mxu0 0.0
    %1862 = vmatpush1.msra.mxu0 0.0
    %1863 = vmatprep.subr.mxu0 0.0
    %1864 = vmatpush1.msra.mxu0 0.0
    %1865 = vmatprep.subr.mxu0 0.0
    %1866 = vmatpush1.msra.mxu0 0.0
    %1867 = vmatprep.subr.mxu0 0.0
    %1868 = vmatpush1.msra.mxu0 0.0
    %1869 = vmatprep.subr.mxu0 0.0
    %1870 = vmatpush1.msra.mxu0 0.0
    %1871 = vmatprep.subr.mxu0 0.0
    %1872 = vmatpush1.msra.mxu0 0.0
    %1873 = vmatprep.subr.mxu0 0.0
    %1874 = vmatpush1.msra.mxu0 0.0
    %1875 = vmatprep.subr.mxu0 0.0
    %1876 = vmatpush1.msra.mxu0 0.0
    %1877 = vmatprep.subr.mxu0 0.0
    %1878 = vmatpush1.msra.mxu0 0.0
    %1879 = vmatprep.subr.mxu0 0.0
    %1880 = vmatpush1.msra.mxu0 0.0
    %1881 = vmatprep.mubr.f32.mxu0 0.0
    %1882 = vmatmul.mubr.f32.gmra.mrb[0].mxu0 %v1812
    %v1883 = vpop.f32.mrb[0].mxu0
    %v1884 = vadd.f32 0.0, %v1883
    %v1885 = vpop.f32.mrb[0].mxu0
    %1886 = vmatprep.mubr.f32.mxu0 0.0
    %1887 = vmatmul.mubr.f32.gmra.mrb[0].mxu0 %v1815
    %v1888 = vpop.f32.mrb[0].mxu0
    %v1889 = vadd.f32 0.0, %v1888
    %v1890 = vpop.f32.mrb[0].mxu0
    %1891 = vdwg.mxu0
    %v1893 = vsel %vm1030, %v1557, 0
    %v1896 = vsel %vm1030, %v1562, 0
    %1898 = vmatprep.subr.mxu0 0.0
    %1899 = vmatpush1.msra.mxu0 %v1808
    %1900 = vmatprep.subr.mxu0 0.0
    %1901 = vmatpush1.msra.mxu0 0.0
    %1902 = vmatprep.subr.mxu0 0.0
    %1903 = vmatpush1.msra.mxu0 0.0
    %1904 = vmatprep.subr.mxu0 0.0
    %1905 = vmatpush1.msra.mxu0 0.0
    %1906 = vmatprep.subr.mxu0 0.0
    %1907 = vmatpush1.msra.mxu0 0.0
    %1908 = vmatprep.subr.mxu0 0.0
    %1909 = vmatpush1.msra.mxu0 0.0
    %1910 = vmatprep.subr.mxu0 0.0
    %1911 = vmatpush1.msra.mxu0 0.0
    %1912 = vmatprep.subr.mxu0 0.0
    %1913 = vmatpush1.msra.mxu0 0.0
    %1914 = vmatprep.subr.mxu0 0.0
    %1915 = vmatpush1.msra.mxu0 0.0
    %1916 = vmatprep.subr.mxu0 0.0
    %1917 = vmatpush1.msra.mxu0 0.0
    %1918 = vmatprep.subr.mxu0 0.0
    %1919 = vmatpush1.msra.mxu0 0.0
    %1920 = vmatprep.subr.mxu0 0.0
    %1921 = vmatpush1.msra.mxu0 0.0
    %1922 = vmatprep.subr.mxu0 0.0
    %1923 = vmatpush1.msra.mxu0 0.0
    %1924 = vmatprep.subr.mxu0 0.0
    %1925 = vmatpush1.msra.mxu0 0.0
    %1926 = vmatprep.subr.mxu0 0.0
    %1927 = vmatpush1.msra.mxu0 0.0
    %1928 = vmatprep.subr.mxu0 0.0
    %1929 = vmatpush1.msra.mxu0 0.0
    %1930 = vmatprep.subr.mxu0 0.0
    %1931 = vmatpush1.msra.mxu0 0.0
    %1932 = vmatprep.subr.mxu0 0.0
    %1933 = vmatpush1.msra.mxu0 0.0
    %1934 = vmatprep.subr.mxu0 0.0
    %1935 = vmatpush1.msra.mxu0 0.0
    %1936 = vmatprep.subr.mxu0 0.0
    %1937 = vmatpush1.msra.mxu0 0.0
    %1938 = vmatprep.subr.mxu0 0.0
    %1939 = vmatpush1.msra.mxu0 0.0
    %1940 = vmatprep.subr.mxu0 0.0
    %1941 = vmatpush1.msra.mxu0 0.0
    %1942 = vmatprep.subr.mxu0 0.0
    %1943 = vmatpush1.msra.mxu0 0.0
    %1944 = vmatprep.subr.mxu0 0.0
    %1945 = vmatpush1.msra.mxu0 0.0
    %1946 = vmatprep.subr.mxu0 0.0
    %1947 = vmatpush1.msra.mxu0 0.0
    %1948 = vmatprep.subr.mxu0 0.0
    %1949 = vmatpush1.msra.mxu0 0.0
    %1950 = vmatprep.subr.mxu0 0.0
    %1951 = vmatpush1.msra.mxu0 0.0
    %1952 = vmatprep.subr.mxu0 0.0
    %1953 = vmatpush1.msra.mxu0 0.0
    %1954 = vmatprep.subr.mxu0 0.0
    %1955 = vmatpush1.msra.mxu0 0.0
    %1956 = vmatprep.subr.mxu0 0.0
    %1957 = vmatpush1.msra.mxu0 0.0
    %1958 = vmatprep.subr.mxu0 0.0
    %1959 = vmatpush1.msra.mxu0 0.0
    %1960 = vmatprep.subr.mxu0 0.0
    %1961 = vmatpush1.msra.mxu0 0.0
    %1962 = vmatprep.mubr.f32.mxu0 0.0
    %1963 = vmatmul.mubr.f32.gmra.mrb[0].mxu0 %v1893
    %v1964 = vpop.f32.mrb[0].mxu0
    %v1965 = vadd.f32 %v1884, %v1964
    %v1966 = vpop.f32.mrb[0].mxu0
    %1967 = vmatprep.mubr.f32.mxu0 0.0
    %1968 = vmatmul.mubr.f32.gmra.mrb[0].mxu0 %v1896
    %v1969 = vpop.f32.mrb[0].mxu0
    %v1970 = vadd.f32 %v1889, %v1969
    %v1971 = vpop.f32.mrb[0].mxu0
    %1972 = vdwg.mxu0
    %s1973 = scalar_lea.vmem %s3, 16
    %v1974 = vld [vmem:[%s1973] sm:$0xff]
    %v1976 = vsel %vm1030, %v1719, 0
    %v1979 = vsel %vm1030, %v1724, 0
    %1981 = vmatprep.subr.mxu0 0.0
    %1982 = vmatpush1.msra.mxu0 %v1974
    %1983 = vmatprep.subr.mxu0 0.0
    %1984 = vmatpush1.msra.mxu0 0.0
    %1985 = vmatprep.subr.mxu0 0.0
    %1986 = vmatpush1.msra.mxu0 0.0
    %1987 = vmatprep.subr.mxu0 0.0
    %1988 = vmatpush1.msra.mxu0 0.0
    %1989 = vmatprep.subr.mxu0 0.0
    %1990 = vmatpush1.msra.mxu0 0.0
    %1991 = vmatprep.subr.mxu0 0.0
    %1992 = vmatpush1.msra.mxu0 0.0
    %1993 = vmatprep.subr.mxu0 0.0
    %1994 = vmatpush1.msra.mxu0 0.0
    %1995 = vmatprep.subr.mxu0 0.0
    %1996 = vmatpush1.msra.mxu0 0.0
    %1997 = vmatprep.subr.mxu0 0.0
    %1998 = vmatpush1.msra.mxu0 0.0
    %1999 = vmatprep.subr.mxu0 0.0
    %2000 = vmatpush1.msra.mxu0 0.0
    %2001 = vmatprep.subr.mxu0 0.0
    %2002 = vmatpush1.msra.mxu0 0.0
    %2003 = vmatprep.subr.mxu0 0.0
    %2004 = vmatpush1.msra.mxu0 0.0
    %2005 = vmatprep.subr.mxu0 0.0
    %2006 = vmatpush1.msra.mxu0 0.0
    %2007 = vmatprep.subr.mxu0 0.0
    %2008 = vmatpush1.msra.mxu0 0.0
    %2009 = vmatprep.subr.mxu0 0.0
    %2010 = vmatpush1.msra.mxu0 0.0
    %2011 = vmatprep.subr.mxu0 0.0
    %2012 = vmatpush1.msra.mxu0 0.0
    %2013 = vmatprep.subr.mxu0 0.0
    %2014 = vmatpush1.msra.mxu0 0.0
    %2015 = vmatprep.subr.mxu0 0.0
    %2016 = vmatpush1.msra.mxu0 0.0
    %2017 = vmatprep.subr.mxu0 0.0
    %2018 = vmatpush1.msra.mxu0 0.0
    %2019 = vmatprep.subr.mxu0 0.0
    %2020 = vmatpush1.msra.mxu0 0.0
    %2021 = vmatprep.subr.mxu0 0.0
    %2022 = vmatpush1.msra.mxu0 0.0
    %2023 = vmatprep.subr.mxu0 0.0
    %2024 = vmatpush1.msra.mxu0 0.0
    %2025 = vmatprep.subr.mxu0 0.0
    %2026 = vmatpush1.msra.mxu0 0.0
    %2027 = vmatprep.subr.mxu0 0.0
    %2028 = vmatpush1.msra.mxu0 0.0
    %2029 = vmatprep.subr.mxu0 0.0
    %2030 = vmatpush1.msra.mxu0 0.0
    %2031 = vmatprep.subr.mxu0 0.0
    %2032 = vmatpush1.msra.mxu0 0.0
    %2033 = vmatprep.subr.mxu0 0.0
    %2034 = vmatpush1.msra.mxu0 0.0
    %2035 = vmatprep.subr.mxu0 0.0
    %2036 = vmatpush1.msra.mxu0 0.0
    %2037 = vmatprep.subr.mxu0 0.0
    %2038 = vmatpush1.msra.mxu0 0.0
    %2039 = vmatprep.subr.mxu0 0.0
    %2040 = vmatpush1.msra.mxu0 0.0
    %2041 = vmatprep.subr.mxu0 0.0
    %2042 = vmatpush1.msra.mxu0 0.0
    %2043 = vmatprep.subr.mxu0 0.0
    %2044 = vmatpush1.msra.mxu0 0.0
    %2045 = vmatprep.mubr.f32.mxu0 0.0
    %2046 = vmatmul.mubr.f32.gmra.mrb[0].mxu0 %v1976
    %v2047 = vpop.f32.mrb[0].mxu0
    %v2048 = vadd.f32 0.0, %v2047
    %v2049 = vpop.f32.mrb[0].mxu0
    %2050 = vmatprep.mubr.f32.mxu0 0.0
    %2051 = vmatmul.mubr.f32.gmra.mrb[0].mxu0 %v1979
    %v2052 = vpop.f32.mrb[0].mxu0
    %v2053 = vadd.f32 0.0, %v2052
    %v2054 = vpop.f32.mrb[0].mxu0
    %2055 = vdwg.mxu0
    %v2056 = vadd.f32 %v1965, %v2048
    %v2057 = vadd.f32 %v1970, %v2053
    %s2058 = scalar_lea.vmem %s3, 24
    %v2059 = vld [vmem:[%s2058] sm:$0xff]
    %v2061 = vsel %vm1030, %v1800, 0
    %v2064 = vsel %vm1030, %v1805, 0
    %2066 = vmatprep.subr.mxu0 0.0
    %2067 = vmatpush1.msra.mxu0 %v2059
    %2068 = vmatprep.subr.mxu0 0.0
    %2069 = vmatpush1.msra.mxu0 0.0
    %2070 = vmatprep.subr.mxu0 0.0
    %2071 = vmatpush1.msra.mxu0 0.0
    %2072 = vmatprep.subr.mxu0 0.0
    %2073 = vmatpush1.msra.mxu0 0.0
    %2074 = vmatprep.subr.mxu0 0.0
    %2075 = vmatpush1.msra.mxu0 0.0
    %2076 = vmatprep.subr.mxu0 0.0
    %2077 = vmatpush1.msra.mxu0 0.0
    %2078 = vmatprep.subr.mxu0 0.0
    %2079 = vmatpush1.msra.mxu0 0.0
    %2080 = vmatprep.subr.mxu0 0.0
    %2081 = vmatpush1.msra.mxu0 0.0
    %2082 = vmatprep.subr.mxu0 0.0
    %2083 = vmatpush1.msra.mxu0 0.0
    %2084 = vmatprep.subr.mxu0 0.0
    %2085 = vmatpush1.msra.mxu0 0.0
    %2086 = vmatprep.subr.mxu0 0.0
    %2087 = vmatpush1.msra.mxu0 0.0
    %2088 = vmatprep.subr.mxu0 0.0
    %2089 = vmatpush1.msra.mxu0 0.0
    %2090 = vmatprep.subr.mxu0 0.0
    %2091 = vmatpush1.msra.mxu0 0.0
    %2092 = vmatprep.subr.mxu0 0.0
    %2093 = vmatpush1.msra.mxu0 0.0
    %2094 = vmatprep.subr.mxu0 0.0
    %2095 = vmatpush1.msra.mxu0 0.0
    %2096 = vmatprep.subr.mxu0 0.0
    %2097 = vmatpush1.msra.mxu0 0.0
    %2098 = vmatprep.subr.mxu0 0.0
    %2099 = vmatpush1.msra.mxu0 0.0
    %2100 = vmatprep.subr.mxu0 0.0
    %2101 = vmatpush1.msra.mxu0 0.0
    %2102 = vmatprep.subr.mxu0 0.0
    %2103 = vmatpush1.msra.mxu0 0.0
    %2104 = vmatprep.subr.mxu0 0.0
    %2105 = vmatpush1.msra.mxu0 0.0
    %2106 = vmatprep.subr.mxu0 0.0
    %2107 = vmatpush1.msra.mxu0 0.0
    %2108 = vmatprep.subr.mxu0 0.0
    %2109 = vmatpush1.msra.mxu0 0.0
    %2110 = vmatprep.subr.mxu0 0.0
    %2111 = vmatpush1.msra.mxu0 0.0
    %2112 = vmatprep.subr.mxu0 0.0
    %2113 = vmatpush1.msra.mxu0 0.0
    %2114 = vmatprep.subr.mxu0 0.0
    %2115 = vmatpush1.msra.mxu0 0.0
    %2116 = vmatprep.subr.mxu0 0.0
    %2117 = vmatpush1.msra.mxu0 0.0
    %2118 = vmatprep.subr.mxu0 0.0
    %2119 = vmatpush1.msra.mxu0 0.0
    %2120 = vmatprep.subr.mxu0 0.0
    %2121 = vmatpush1.msra.mxu0 0.0
    %2122 = vmatprep.subr.mxu0 0.0
    %2123 = vmatpush1.msra.mxu0 0.0
    %2124 = vmatprep.subr.mxu0 0.0
    %2125 = vmatpush1.msra.mxu0 0.0
    %2126 = vmatprep.subr.mxu0 0.0
    %2127 = vmatpush1.msra.mxu0 0.0
    %2128 = vmatprep.subr.mxu0 0.0
    %2129 = vmatpush1.msra.mxu0 0.0
    %2130 = vmatprep.mubr.f32.mxu0 0.0
    %2131 = vmatmul.mubr.f32.gmra.mrb[0].mxu0 %v2061
    %v2132 = vpop.f32.mrb[0].mxu0
    %v2133 = vadd.f32 0.0, %v2132
    %v2134 = vpop.f32.mrb[0].mxu0
    %2135 = vmatprep.mubr.f32.mxu0 0.0
    %2136 = vmatmul.mubr.f32.gmra.mrb[0].mxu0 %v2064
    %v2137 = vpop.f32.mrb[0].mxu0
    %v2138 = vadd.f32 0.0, %v2137
    %v2139 = vpop.f32.mrb[0].mxu0
    %2140 = vdwg.mxu0
    %v2141 = vadd.f32 %v2056, %v2133
    %v2142 = vadd.f32 %v2057, %v2138
    %v2143 = vadd.f32 %v30, %v2141
    %v2144 = vadd.f32 %v31, %v2142
    %v2145 = vsel %vm34, %v2143, 0.0
    %2146 = vadd.xlane.f32.xlu0 %v2145
    %v2147 = vpop.xlane.xlu0 %2146
    %v2148 = vsel %vm34, %v2144, 0.0
    %2149 = vadd.xlane.f32.xlu0 %v2148
    %v2150 = vpop.xlane.xlu0 %2149
    %v2151 = vmul.f32 %v2147, %v41
    %v2152 = vmul.f32 %v2150, %v41
    %v2153 = vsub.f32 %v2143, %v2151
    %v2154 = vsub.f32 %v2144, %v2152
    %v2155 = vmul.f32 %v2153, %v2153
    %v2156 = vmul.f32 %v2154, %v2154
    %v2157 = vsel %vm34, %v2155, 0.0
    %2158 = vadd.xlane.f32.xlu0 %v2157
    %v2159 = vpop.xlane.xlu0 %2158
    %v2160 = vsel %vm34, %v2156, 0.0
    %2161 = vadd.xlane.f32.xlu0 %v2160
    %v2162 = vpop.xlane.xlu0 %2161
    %v2163 = vmul.f32 %v2159, 0.032258064
    %v2164 = vmul.f32 %v2162, 0.032258064
    %v2165 = vrsqrt.pop %v2163
    %v2166 = vmul.f32 %v2163, %v2165
    %vm2167 = vcmp.eq.f32.partialorder %v2163, inf
    %v2168 = vsel %vm2167, %v2163, %v2166
    %vm2169 = vcmp.eq.f32.partialorder %v2163, 0.0
    %v2170 = vand.u32 %v2163, 2147483648
    %v2171 = vsel %vm2169, %v2170, %v2168
    %v2172 = vrsqrt.pop %v2164
    %v2173 = vmul.f32 %v2164, %v2172
    %vm2174 = vcmp.eq.f32.partialorder %v2164, inf
    %v2175 = vsel %vm2174, %v2164, %v2173
    %vm2176 = vcmp.eq.f32.partialorder %v2164, 0.0
    %v2177 = vand.u32 %v2164, 2147483648
    %v2178 = vsel %vm2176, %v2177, %v2175
    %v2179 = vadd.f32 %v2171, 1e-06
    %v2180 = vadd.f32 %v2178, 1e-06
    %v2181 = vrcp.pop %v2179
    %v2182 = vmul.f32 %v2153, %v2181
    %v2183 = vrcp.pop %v2180
    %v2184 = vmul.f32 %v2154, %v2183
    %v2185 = vld [vmem:[%s4] sm:$0xff]
    %v2186 = vld [vmem:[%s4 + $0x8] sm:$0xff]
    %v2187 = vld [vmem:[%s4 + $0x10] sm:$0xff]
    %v2188 = vld [vmem:[%s4 + $0x18] sm:$0xff]
    %v2189 = vld [vmem:[%s5] sm:$0x1]
    %v2191 = vlaneseq
    %v2192 = vshrl.u32 %v2191, 7
    %v2193 = vsub.s32 0, %v2192
    %v2194 = vrot.slane %v2189, %v2193
    %v2197 = vsel %vm34, %v2182, 0
    %v2200 = vsel %vm34, %v2184, 0
    %2202 = vmatprep.subr.mxu0 0.0
    %2203 = vmatpush1.msra.mxu0 %v2185
    %2204 = vmatprep.subr.mxu0 0.0
    %2205 = vmatpush1.msra.mxu0 %v2186
    %2206 = vmatprep.subr.mxu0 0.0
    %2207 = vmatpush1.msra.mxu0 %v2187
    %2208 = vmatprep.subr.mxu0 0.0
    %2209 = vmatpush1.msra.mxu0 %v2188
    %2210 = vmatprep.subr.mxu0 0.0
    %2211 = vmatpush1.msra.mxu0 0.0
    %2212 = vmatprep.subr.mxu0 0.0
    %2213 = vmatpush1.msra.mxu0 0.0
    %2214 = vmatprep.subr.mxu0 0.0
    %2215 = vmatpush1.msra.mxu0 0.0
    %2216 = vmatprep.subr.mxu0 0.0
    %2217 = vmatpush1.msra.mxu0 0.0
    %2218 = vmatprep.subr.mxu0 0.0
    %2219 = vmatpush1.msra.mxu0 0.0
    %2220 = vmatprep.subr.mxu0 0.0
    %2221 = vmatpush1.msra.mxu0 0.0
    %2222 = vmatprep.subr.mxu0 0.0
    %2223 = vmatpush1.msra.mxu0 0.0
    %2224 = vmatprep.subr.mxu0 0.0
    %2225 = vmatpush1.msra.mxu0 0.0
    %2226 = vmatprep.subr.mxu0 0.0
    %2227 = vmatpush1.msra.mxu0 0.0
    %2228 = vmatprep.subr.mxu0 0.0
    %2229 = vmatpush1.msra.mxu0 0.0
    %2230 = vmatprep.subr.mxu0 0.0
    %2231 = vmatpush1.msra.mxu0 0.0
    %2232 = vmatprep.subr.mxu0 0.0
    %2233 = vmatpush1.msra.mxu0 0.0
    %2234 = vmatprep.subr.mxu0 0.0
    %2235 = vmatpush1.msra.mxu0 0.0
    %2236 = vmatprep.subr.mxu0 0.0
    %2237 = vmatpush1.msra.mxu0 0.0
    %2238 = vmatprep.subr.mxu0 0.0
    %2239 = vmatpush1.msra.mxu0 0.0
    %2240 = vmatprep.subr.mxu0 0.0
    %2241 = vmatpush1.msra.mxu0 0.0
    %2242 = vmatprep.subr.mxu0 0.0
    %2243 = vmatpush1.msra.mxu0 0.0
    %2244 = vmatprep.subr.mxu0 0.0
    %2245 = vmatpush1.msra.mxu0 0.0
    %2246 = vmatprep.subr.mxu0 0.0
    %2247 = vmatpush1.msra.mxu0 0.0
    %2248 = vmatprep.subr.mxu0 0.0
    %2249 = vmatpush1.msra.mxu0 0.0
    %2250 = vmatprep.subr.mxu0 0.0
    %2251 = vmatpush1.msra.mxu0 0.0
    %2252 = vmatprep.subr.mxu0 0.0
    %2253 = vmatpush1.msra.mxu0 0.0
    %2254 = vmatprep.subr.mxu0 0.0
    %2255 = vmatpush1.msra.mxu0 0.0
    %2256 = vmatprep.subr.mxu0 0.0
    %2257 = vmatpush1.msra.mxu0 0.0
    %2258 = vmatprep.subr.mxu0 0.0
    %2259 = vmatpush1.msra.mxu0 0.0
    %2260 = vmatprep.subr.mxu0 0.0
    %2261 = vmatpush1.msra.mxu0 0.0
    %2262 = vmatprep.subr.mxu0 0.0
    %2263 = vmatpush1.msra.mxu0 0.0
    %2264 = vmatprep.subr.mxu0 0.0
    %2265 = vmatpush1.msra.mxu0 0.0
    %2266 = vmatprep.mubr.f32.mxu0 0.0
    %2267 = vmatmul.mubr.f32.gmra.mrb[0].mxu0 %v2197
    %v2268 = vpop.f32.mrb[0].mxu0
    %v2269 = vadd.f32 %v2194, %v2268
    %v2270 = vpop.f32.mrb[0].mxu0
    %2271 = vmatprep.mubr.f32.mxu0 0.0
    %2272 = vmatmul.mubr.f32.gmra.mrb[0].mxu0 %v2200
    %v2273 = vpop.f32.mrb[0].mxu0
    %v2274 = vadd.f32 %v2194, %v2273
    %v2275 = vpop.f32.mrb[0].mxu0
    %2276 = vdwg.mxu0
    %v2277 = vmax.f32 %v2269, 0.0
    %v2278 = vmax.f32 %v2274, 0.0
    %v2279 = vld [vmem:[%s6] sm:$0xff]
    %v2280 = vld [vmem:[%s6 + $0x8] sm:$0xff]
    %v2281 = vld [vmem:[%s6 + $0x10] sm:$0xff]
    %v2282 = vld [vmem:[%s6 + $0x18] sm:$0xff]
    %v2283 = vld [vmem:[%s6 + $0x20] sm:$0xff]
    %v2284 = vld [vmem:[%s6 + $0x28] sm:$0xff]
    %v2285 = vld [vmem:[%s6 + $0x30] sm:$0xff]
    %v2286 = vld [vmem:[%s6 + $0x38] sm:$0xff]
    %v2287 = vld [vmem:[%s7] sm:$0x1]
    %v2289 = vlaneseq
    %v2290 = vshrl.u32 %v2289, 7
    %v2291 = vsub.s32 0, %v2290
    %v2292 = vrot.slane %v2287, %v2291
    %vm2294 = vcmask 523264
    %v2296 = vsel %vm2294, %v2277, 0
    %v2299 = vsel %vm2294, %v2278, 0
    %2301 = vmatprep.subr.mxu0 0.0
    %2302 = vmatpush1.msra.mxu0 %v2279
    %2303 = vmatprep.subr.mxu0 0.0
    %2304 = vmatpush1.msra.mxu0 %v2280
    %2305 = vmatprep.subr.mxu0 0.0
    %2306 = vmatpush1.msra.mxu0 %v2281
    %2307 = vmatprep.subr.mxu0 0.0
    %2308 = vmatpush1.msra.mxu0 %v2282
    %2309 = vmatprep.subr.mxu0 0.0
    %2310 = vmatpush1.msra.mxu0 %v2283
    %2311 = vmatprep.subr.mxu0 0.0
    %2312 = vmatpush1.msra.mxu0 %v2284
    %2313 = vmatprep.subr.mxu0 0.0
    %2314 = vmatpush1.msra.mxu0 %v2285
    %2315 = vmatprep.subr.mxu0 0.0
    %2316 = vmatpush1.msra.mxu0 %v2286
    %2317 = vmatprep.subr.mxu0 0.0
    %2318 = vmatpush1.msra.mxu0 0.0
    %2319 = vmatprep.subr.mxu0 0.0
    %2320 = vmatpush1.msra.mxu0 0.0
    %2321 = vmatprep.subr.mxu0 0.0
    %2322 = vmatpush1.msra.mxu0 0.0
    %2323 = vmatprep.subr.mxu0 0.0
    %2324 = vmatpush1.msra.mxu0 0.0
    %2325 = vmatprep.subr.mxu0 0.0
    %2326 = vmatpush1.msra.mxu0 0.0
    %2327 = vmatprep.subr.mxu0 0.0
    %2328 = vmatpush1.msra.mxu0 0.0
    %2329 = vmatprep.subr.mxu0 0.0
    %2330 = vmatpush1.msra.mxu0 0.0
    %2331 = vmatprep.subr.mxu0 0.0
    %2332 = vmatpush1.msra.mxu0 0.0
    %2333 = vmatprep.subr.mxu0 0.0
    %2334 = vmatpush1.msra.mxu0 0.0
    %2335 = vmatprep.subr.mxu0 0.0
    %2336 = vmatpush1.msra.mxu0 0.0
    %2337 = vmatprep.subr.mxu0 0.0
    %2338 = vmatpush1.msra.mxu0 0.0
    %2339 = vmatprep.subr.mxu0 0.0
    %2340 = vmatpush1.msra.mxu0 0.0
    %2341 = vmatprep.subr.mxu0 0.0
    %2342 = vmatpush1.msra.mxu0 0.0
    %2343 = vmatprep.subr.mxu0 0.0
    %2344 = vmatpush1.msra.mxu0 0.0
    %2345 = vmatprep.subr.mxu0 0.0
    %2346 = vmatpush1.msra.mxu0 0.0
    %2347 = vmatprep.subr.mxu0 0.0
    %2348 = vmatpush1.msra.mxu0 0.0
    %2349 = vmatprep.subr.mxu0 0.0
    %2350 = vmatpush1.msra.mxu0 0.0
    %2351 = vmatprep.subr.mxu0 0.0
    %2352 = vmatpush1.msra.mxu0 0.0
    %2353 = vmatprep.subr.mxu0 0.0
    %2354 = vmatpush1.msra.mxu0 0.0
    %2355 = vmatprep.subr.mxu0 0.0
    %2356 = vmatpush1.msra.mxu0 0.0
    %2357 = vmatprep.subr.mxu0 0.0
    %2358 = vmatpush1.msra.mxu0 0.0
    %2359 = vmatprep.subr.mxu0 0.0
    %2360 = vmatpush1.msra.mxu0 0.0
    %2361 = vmatprep.subr.mxu0 0.0
    %2362 = vmatpush1.msra.mxu0 0.0
    %2363 = vmatprep.subr.mxu0 0.0
    %2364 = vmatpush1.msra.mxu0 0.0
    %2365 = vmatprep.mubr.f32.mxu0 0.0
    %2366 = vmatmul.mubr.f32.gmra.mrb[0].mxu0 %v2296
    %v2367 = vpop.f32.mrb[0].mxu0
    %v2368 = vadd.f32 %v2292, %v2367
    %v2369 = vpop.f32.mrb[0].mxu0
    %2370 = vmatprep.mubr.f32.mxu0 0.0
    %2371 = vmatmul.mubr.f32.gmra.mrb[0].mxu0 %v2299
    %v2372 = vpop.f32.mrb[0].mxu0
    %v2373 = vadd.f32 %v2292, %v2372
    %v2374 = vpop.f32.mrb[0].mxu0
    %2375 = vdwg.mxu0
    %v2376 = vadd.f32 %v2143, %v2368
    %v2377 = vadd.f32 %v2144, %v2373
    %2378 = vst.msk [vmem:[#allocation2] sm:$0xff] %vm34, %v2376
    %2379 = vst.msk [vmem:[#allocation2 + $0x8] sm:$0xff] %vm34, %v2377
    // Predicated region
    $region34: #{tpu_custom_call.1} parent=1 // pred_check
      _
    $region35: #{tpu_custom_call.1} parent=1 // pred_check_branch
      %2381 = sbr.rel (0) target = $region37
    $region36: #{tpu_custom_call.1} parent=1 // pred_region
      %s2383 = ssub.s32 256, 256
      %2384 = vsyncadd [#allocation3], %s2383
      %s2385 = sshll.u32 [#allocation2], 4
      %s2386 = int_to_ptr.vmem [resolvable:$true] %s2385
      %2391 = dma.vmem_to_hbm [thread:$0]  %s2386, 256, %s8, [#allocation3], 128, 128, 8
    $region37: #{tpu_custom_call.1} parent=1 // pred_fallthru
      _
    // Predicated region
    $region38: #{tpu_custom_call.1} parent=1 // pred_check
      _
    $region39: #{tpu_custom_call.1} parent=1 // pred_check_branch
      %2393 = sbr.rel (0) target = $region41
    $region40: #{tpu_custom_call.1} parent=1 // pred_region
      %2394 = dma.done [#allocation3], 256
    $region41: #{tpu_custom_call.1} parent=1 // pred_fallthru
      _
    %2395 = vsyncpa [#allocation3], 1

</llo_original>
